<compile_context>
chip_gen: v5e
topology: v5e:2x2
jax: 0.10.0
libtpu: 0.0.40
codegen_flags: <defaults>
</compile_context>

<pallas_src>
import math
import functools

import jax
import jax.numpy as jnp
from jax.experimental import pallas as pl
from jax.experimental.pallas import tpu as pltpu


# ---------------------------------------------------------------------------
# Pallas kernel: full transformer stack; grid = (batch_block, layer)
# ---------------------------------------------------------------------------
def _encoder_stack_kernel(x_ref, km_ref,
                          wqkv_ref, bqkv_ref, wo_ref, bo_ref,
                          g1_ref, be1_ref,
                          w1_ref, b1_ref, w2_ref, b2_ref,
                          g2_ref, be2_ref,
                          out_ref,
                          *, num_heads):
    layer = pl.program_id(1)

    # Layer 0: seed the VMEM-resident activation.  The out block index is the
    # same for every layer, so out_ref acts as the layer-to-layer accumulator
    # and the activation never round-trips HBM inside the stack.
    @pl.when(layer == 0)
    def _():
        out_ref[...] = x_ref[...].astype(out_ref.dtype)

    Bt, S, D = out_ref.shape
    H = num_heads
    dh = D // H

    x = out_ref[...].astype(jnp.float32).reshape(Bt * S, D)    # (M, D), M = Bt*S
    km = km_ref[...]                                           # (Bt, S) additive mask

    # ---- fused QKV projection: one full-width GEMM (M=Bt*S, K=D, N=3D) -----
    x_bf = x.astype(jnp.bfloat16)
    qkv = jnp.dot(x_bf, wqkv_ref[0],
                  preferred_element_type=jnp.float32) + bqkv_ref[0]      # (M, 3D)

    def to_heads(t):   # (M, D) f32 -> (Bt*H, S, dh) bf16
        return (t.reshape(Bt, S, H, dh).transpose(0, 2, 1, 3)
                 .reshape(Bt * H, S, dh).astype(jnp.bfloat16))

    q = to_heads(qkv[:, 0:D])          # 1/sqrt(dh) already folded into Wq / bq
    k = to_heads(qkv[:, D:2 * D])
    v = to_heads(qkv[:, 2 * D:3 * D])

    # ---- scaled dot-product attention, softmax in f32 ----------------------
    # TODO(synk): flash-style query tiling for production S (see header).
    s = jnp.einsum("bqd,bkd->bqk", q, k,
                   preferred_element_type=jnp.float32)                   # (Bt*H, S, S)
    s = (s.reshape(Bt, H, S, S) + km[:, None, None, :]).reshape(Bt * H, S, S)
    s = s - jnp.max(s, axis=-1, keepdims=True)
    p = jnp.exp(s)
    p = p * pl.reciprocal(jnp.sum(p, axis=-1, keepdims=True), approx=True)
    o = jnp.einsum("bqk,bkd->bqd", p.astype(jnp.bfloat16), v,
                   preferred_element_type=jnp.float32)                    # (Bt*H, S, dh)

    # merge heads back to lane-contiguous (M, D), then ONE (D, D) GEMM
    o = (o.reshape(Bt, H, S, dh).transpose(0, 2, 1, 3)
          .reshape(Bt * S, D).astype(jnp.bfloat16))
    attn = jnp.dot(o, wo_ref[0], preferred_element_type=jnp.float32) + bo_ref[0]

    # ---- residual + LayerNorm 1 (biased variance, eps=1e-5, like PyTorch) --
    y = x + attn
    mu = jnp.mean(y, axis=-1, keepdims=True)
    var = jnp.mean((y - mu) ** 2, axis=-1, keepdims=True)
    y = (y - mu) * jax.lax.rsqrt(var + 1e-5) * g1_ref[0] + be1_ref[0]

    # ---- FFN: relu(y W1 + b1) W2 + b2, bf16 matmuls with f32 accumulation --
    # TODO(synk): optional fp8 W1/W2 on v7x (per-channel scales + accuracy check).
    h1 = jnp.dot(y.astype(jnp.bfloat16), w1_ref[0],
                 preferred_element_type=jnp.float32) + b1_ref[0]
    h1 = jnp.maximum(h1, 0.0)
    h2 = jnp.dot(h1.astype(jnp.bfloat16), w2_ref[0],
                 preferred_element_type=jnp.float32) + b2_ref[0]

    # ---- residual + LayerNorm 2 ---------------------------------------------
    z = y + h2
    mu2 = jnp.mean(z, axis=-1, keepdims=True)
    var2 = jnp.mean((z - mu2) ** 2, axis=-1, keepdims=True)
    z = (z - mu2) * jax.lax.rsqrt(var2 + 1e-5) * g2_ref[0] + be2_ref[0]

    out_ref[...] = z.reshape(Bt, S, D).astype(out_ref.dtype)


def _vmem_limit_bytes():
    # ~3/4 of per-core VMEM: ~48 MiB on v7x (64 MiB/TC), ~96 MiB on v5e/v6e
    # (128 MiB).  Leaves headroom for double-buffered weight blocks + scratch.
    try:
        cap = int(getattr(pltpu.get_tpu_info(), "vmem_capacity_bytes",
                          128 * 1024 * 1024))
    except Exception:
        cap = 128 * 1024 * 1024
    return min((cap * 3) // 4, 96 * 1024 * 1024)


def transformer_encoder_stack(x, key_add_mask, packed, num_heads, block_batch=None):
    B, S, D = x.shape
    L = packed["wqkv"].shape[0]
    F = packed["w1"].shape[-1]

    # Batch rows per grid step: larger Bt amortizes per-layer weight DMA across
    # more rows and grows the GEMM M dim.  Size it so Bt*S activations + the
    # largest double-buffered weight block fit the VMEM budget (smaller on v7x).
    Bt = B if block_batch is None else block_batch
    assert B % Bt == 0

    def wspec(shape):
        # per-layer parameter: blocked only along the leading layer axis
        return pl.BlockSpec((1,) + shape,
                            lambda b, l, _n=len(shape): (l,) + (0,) * _n)

    kernel = functools.partial(_encoder_stack_kernel, num_heads=num_heads)
    return pl.pallas_call(
        kernel,
        out_shape=jax.ShapeDtypeStruct((B, S, D), jnp.float32),
        grid=(B // Bt, L),
        in_specs=[
            pl.BlockSpec((Bt, S, D), lambda b, l: (b, 0, 0)),   # x (read at layer 0 only)
            pl.BlockSpec((Bt, S), lambda b, l: (b, 0)),          # per-key additive mask
            wspec((D, 3 * D)), wspec((1, 3 * D)),                # Wqkv, bqkv (scale folded)
            wspec((D, D)), wspec((1, D)),                        # Wo, bo
            wspec((1, D)), wspec((1, D)),                        # LN1 gamma, beta
            wspec((D, F)), wspec((1, F)),                        # W1, b1
            wspec((F, D)), wspec((1, D)),                        # W2, b2
            wspec((1, D)), wspec((1, D)),                        # LN2 gamma, beta
        ],
        out_specs=pl.BlockSpec((Bt, S, D), lambda b, l: (b, 0, 0)),
        compiler_params=pltpu.CompilerParams(
            dimension_semantics=("parallel", "arbitrary"),
            vmem_limit_bytes=_vmem_limit_bytes(),
        ),
    )(x, key_add_mask,
      packed["wqkv"], packed["bqkv"], packed["wo"], packed["bo"],
      packed["ln1_g"], packed["ln1_b"],
      packed["w1"], packed["b1"], packed["w2"], packed["b2"],
      packed["ln2_g"], packed["ln2_b"])


# ---------------------------------------------------------------------------
# Glue: embeddings, sinusoidal positional encoding, output gather
# ---------------------------------------------------------------------------
def sinusoidal_pe(max_len, d_model):
    position = jnp.arange(max_len, dtype=jnp.float32)[:, None]
    div_term = jnp.exp(jnp.arange(0, d_model, 2, dtype=jnp.float32)
                       * (-math.log(10000.0) / d_model))
    pe = jnp.zeros((max_len, d_model), jnp.float32)
    pe = pe.at[:, 0::2].set(jnp.sin(position * div_term))
    pe = pe.at[:, 1::2].set(jnp.cos(position * div_term))
    return pe


def transformer_encoder_forward(params, input_a, input_b, input_attention_mask,
                                input_position_ids, input_source_gather_index,
                                *, num_heads, block_batch=None):
    # embeddings (lookup = glue; additions are trivially elementwise)
    emb_a = jnp.take(params["embed_a"], input_a, axis=0)        # (B, S, D)
    emb_b = jnp.take(params["embed_b"], input_b, axis=0)        # (B, S, D)
    x = emb_a + emb_b

    # positional embedding gathered by position_ids; dropout is identity (eval)
    x = x + jnp.take(params["pe"], input_position_ids, axis=0)

    # _flip_attention_mask: True -> 0, False -> -inf (large negative finite).
    # The encoder's (B,S,S) mask is key-padding structured (identical across
    # query rows), so only the per-key (B,S) row is passed to the kernel.
    # TODO(synk): a general per-query (B,S,S) mask would need the dense path.
    key_add_mask = jnp.where(input_attention_mask[:, 0, :], 0.0, -1e9).astype(jnp.float32)

    # whole layer stack in one fused pallas_call
    x = transformer_encoder_stack(x, key_add_mask, params["packed_layers"],
                                  num_heads, block_batch=block_batch)

    # torch.gather(input, dim=1, index=gather_index.expand(..., D))
    B, Ssrc = input_source_gather_index.shape
    D = x.shape[-1]
    idx = jnp.broadcast_to(input_source_gather_index[:, :, None], (B, Ssrc, D))
    return jnp.take_along_axis(x, idx, axis=1)


# ---------------------------------------------------------------------------
# Deterministic parameter construction + packing for the kernel
# ---------------------------------------------------------------------------
def pack_layer_params(layers, num_heads):
    """Stack per-layer params (leading dim L); fuse QKV; fold the attention
    scale into Wq/bq; cast GEMM weights to bf16."""
    D = layers[0]["wq"].shape[0]
    dh = D // num_heads
    scale = 1.0 / math.sqrt(dh)

    def stack(name):
        return jnp.stack([lp[name] for lp in layers], axis=0)

    wqkv = jnp.concatenate([stack("wq") * scale, stack("wk"), stack("wv")],
                           axis=-1)                                   # (L, D, 3D)
    bqkv = jnp.concatenate([stack("bq") * scale, stack("bk"), stack("bv")],
                           axis=-1)                                   # (L, 1, 3D)

    bf16 = jnp.bfloat16
    # TODO(synk): pad D / 3D / F to multiples of 256 here when model dims (e.g.
    #             GloVe D=300) are not aligned to the v6e/v7x 256x256 MXU tiles.
    return dict(
        wqkv=wqkv.astype(bf16), bqkv=bqkv,
        wo=stack("wo").astype(bf16), bo=stack("bo"),
        ln1_g=stack("ln1_g"), ln1_b=stack("ln1_b"),
        w1=stack("w1").astype(bf16), b1=stack("b1"),
        w2=stack("w2").astype(bf16), b2=stack("b2"),
        ln2_g=stack("ln2_g"), ln2_b=stack("ln2_b"),
    )


def init_params(key, *, vocab_a, vocab_b, D, F, num_layers, num_heads, max_len):
    def nrm(k, shape, scale=0.02):
        return (scale * jax.random.normal(k, shape)).astype(jnp.float32)

    keys = jax.random.split(key, 2 + num_layers)
    # GloVe-style table: row 0 is the zero vector (matches from_pretrained cat)
    embed_a = nrm(keys[0], (vocab_a, D)).at[0].set(0.0)
    embed_b = nrm(keys[1], (vocab_b, D))

    raw_layers = []
    for li in range(num_layers):
        lk = jax.random.split(keys[2 + li], 6)
        raw_layers.append(dict(
            wq=nrm(lk[0], (D, D)), bq=jnp.zeros((1, D), jnp.float32),
            wk=nrm(lk[1], (D, D)), bk=jnp.zeros((1, D), jnp.float32),
            wv=nrm(lk[2], (D, D)), bv=jnp.zeros((1, D), jnp.float32),
            wo=nrm(lk[3], (D, D)), bo=jnp.zeros((1, D), jnp.float32),
            ln1_g=jnp.ones((1, D), jnp.float32), ln1_b=jnp.zeros((1, D), jnp.float32),
            w1=nrm(lk[4], (D, F)), b1=jnp.zeros((1, F), jnp.float32),
            w2=nrm(lk[5], (F, D)), b2=jnp.zeros((1, D), jnp.float32),
            ln2_g=jnp.ones((1, D), jnp.float32), ln2_b=jnp.zeros((1, D), jnp.float32),
        ))

    return dict(embed_a=embed_a, embed_b=embed_b, pe=sinusoidal_pe(max_len, D),
                packed_layers=pack_layer_params(raw_layers, num_heads=num_heads))


if __name__ == "__main__":
    # Small shapes consistent with the module's forward contract.
    B, S, D, H, F, L = 2, 8, 64, 4, 128, 2
    VOCAB_A, VOCAB_B = 50, 11
    MAX_SRC = 6
    MAX_LEN = 64  # positional-encoding table length (module default is 5000)

    key = jax.random.PRNGKey(0)
    k_par, k_a, k_b, k_g = jax.random.split(key, 4)

    params = init_params(k_par, vocab_a=VOCAB_A, vocab_b=VOCAB_B, D=D, F=F,
                         num_layers=L, num_heads=H, max_len=MAX_LEN)

    input_a = jax.random.randint(k_a, (B, S), 0, VOCAB_A, dtype=jnp.int32)
    input_b = jax.random.randint(k_b, (B, S), 0, VOCAB_B, dtype=jnp.int32)

    # key-style attention mask: token i may attend to key j iff j < length[b]
    lengths = jnp.array([S, S - 2], dtype=jnp.int32)
    key_valid = jnp.arange(S)[None, :] < lengths[:, None]                  # (B, S)
    input_attention_mask = jnp.broadcast_to(key_valid[:, None, :], (B, S, S))

    input_position_ids = jnp.broadcast_to(jnp.arange(S, dtype=jnp.int32)[None, :], (B, S))
    input_source_gather_index = jax.random.randint(k_g, (B, MAX_SRC), 0, S, dtype=jnp.int32)

    out = transformer_encoder_forward(
        params, input_a, input_b, input_attention_mask,
        input_position_ids, input_source_gather_index,
        num_heads=H)
    out = jax.block_until_ready(out)

    assert out.shape == (B, MAX_SRC, D), out.shape
    assert bool(jnp.all(jnp.isfinite(out)))
    print("KERNEL_OK")
</pallas_src>

<mosaic_0001>
module attributes {stable_mosaic.version = 11 : i64} {
  func.func @_encoder_stack_kernel(%arg0: i32, %arg1: i32, %arg2: memref<2x8x64xf32, #tpu.memory_space<vmem>>, %arg3: memref<2x8xf32, #tpu.memory_space<vmem>>, %arg4: memref<1x64x192xbf16, #tpu.memory_space<vmem>>, %arg5: memref<1x1x192xf32, #tpu.memory_space<vmem>>, %arg6: memref<1x64x64xbf16, #tpu.memory_space<vmem>>, %arg7: memref<1x1x64xf32, #tpu.memory_space<vmem>>, %arg8: memref<1x1x64xf32, #tpu.memory_space<vmem>>, %arg9: memref<1x1x64xf32, #tpu.memory_space<vmem>>, %arg10: memref<1x64x128xbf16, #tpu.memory_space<vmem>>, %arg11: memref<1x1x128xf32, #tpu.memory_space<vmem>>, %arg12: memref<1x128x64xbf16, #tpu.memory_space<vmem>>, %arg13: memref<1x1x64xf32, #tpu.memory_space<vmem>>, %arg14: memref<1x1x64xf32, #tpu.memory_space<vmem>>, %arg15: memref<1x1x64xf32, #tpu.memory_space<vmem>>, %arg16: memref<2x8x64xf32, #tpu.memory_space<vmem>>) attributes {dimension_semantics = [#tpu.dimension_semantics<parallel>, #tpu.dimension_semantics<arbitrary>], iteration_bounds = array<i64: 1, 2>, scalar_prefetch = 0 : i64, scratch_operands = 0 : i64, tpu.core_type = #tpu.core_type<tc>, window_params = [{transform_indices = @transform_0, window_bounds = array<i64: 2, 8, 64>}, {transform_indices = @transform_1, window_bounds = array<i64: 2, 8>}, {transform_indices = @transform_2, window_bounds = array<i64: 1, 64, 192>}, {transform_indices = @transform_3, window_bounds = array<i64: 1, 1, 192>}, {transform_indices = @transform_4, window_bounds = array<i64: 1, 64, 64>}, {transform_indices = @transform_5, window_bounds = array<i64: 1, 1, 64>}, {transform_indices = @transform_6, window_bounds = array<i64: 1, 1, 64>}, {transform_indices = @transform_7, window_bounds = array<i64: 1, 1, 64>}, {transform_indices = @transform_8, window_bounds = array<i64: 1, 64, 128>}, {transform_indices = @transform_9, window_bounds = array<i64: 1, 1, 128>}, {transform_indices = @transform_10, window_bounds = array<i64: 1, 128, 64>}, {transform_indices = @transform_11, window_bounds = array<i64: 1, 1, 64>}, {transform_indices = @transform_12, window_bounds = array<i64: 1, 1, 64>}, {transform_indices = @transform_13, window_bounds = array<i64: 1, 1, 64>}, {transform_indices = @transform_14, window_bounds = array<i64: 2, 8, 64>}]} {
    %c0_i32 = arith.constant 0 : i32
    %0 = arith.cmpi eq, %arg1, %c0_i32 : i32
    %1 = arith.extui %0 : i1 to i32
    %c0_i32_0 = arith.constant 0 : i32
    %2 = arith.cmpi ne, %1, %c0_i32_0 : i32
    scf.if %2 {
      %c0_62 = arith.constant 0 : index
      %c0_63 = arith.constant 0 : index
      %c0_64 = arith.constant 0 : index
      %132 = vector.load %arg2[%c0_62, %c0_63, %c0_64] : memref<2x8x64xf32, #tpu.memory_space<vmem>>, vector<2x8x64xf32>
      %c0_65 = arith.constant 0 : index
      %c0_66 = arith.constant 0 : index
      %c0_67 = arith.constant 0 : index
      %133 = vector.load %arg16[%c0_65, %c0_66, %c0_67] : memref<2x8x64xf32, #tpu.memory_space<vmem>>, vector<2x8x64xf32>
      tpu.vector_store %arg16[%c0_65, %c0_66, %c0_67], %132 {strides = array<i32>} : memref<2x8x64xf32, #tpu.memory_space<vmem>>, vector<2x8x64xf32>,
    } else {
    }
    %c0 = arith.constant 0 : index
    %c0_1 = arith.constant 0 : index
    %c0_2 = arith.constant 0 : index
    %3 = vector.load %arg16[%c0, %c0_1, %c0_2] : memref<2x8x64xf32, #tpu.memory_space<vmem>>, vector<2x8x64xf32>
    %4 = vector.shape_cast %3 : vector<2x8x64xf32> to vector<16x64xf32>
    %c0_3 = arith.constant 0 : index
    %c0_4 = arith.constant 0 : index
    %5 = vector.load %arg3[%c0_3, %c0_4] : memref<2x8xf32, #tpu.memory_space<vmem>>, vector<2x8xf32>
    %6 = arith.truncf %4 : vector<16x64xf32> to vector<16x64xbf16>
    %c0_5 = arith.constant 0 : index
    %c0_6 = arith.constant 0 : index
    %c0_7 = arith.constant 0 : index
    %7 = vector.load %arg4[%c0_5, %c0_6, %c0_7] : memref<1x64x192xbf16, #tpu.memory_space<vmem>>, vector<1x64x192xbf16>
    %8 = vector.shape_cast %7 : vector<1x64x192xbf16> to vector<64x192xbf16>
    %cst = arith.constant dense<0.000000e+00> : vector<16x192xf32>
    %9 = tpu.matmul %6, %8, %cst {dimension_numbers = #tpu.dot_dimension_numbers<[1], [0], [0], [1], [0, 0, 1, 1], [], []>} : vector<16x64xbf16>, vector<64x192xbf16>, vector<16x192xf32> -> vector<16x192xf32>
    %c0_8 = arith.constant 0 : index
    %c0_9 = arith.constant 0 : index
    %c0_10 = arith.constant 0 : index
    %10 = vector.load %arg5[%c0_8, %c0_9, %c0_10] : memref<1x1x192xf32, #tpu.memory_space<vmem>>, vector<1x1x192xf32>
    %11 = vector.shape_cast %10 : vector<1x1x192xf32> to vector<1x192xf32>
    %12 = vector.broadcast %11 : vector<1x192xf32> to vector<16x192xf32>
    %13 = arith.addf %9, %12 : vector<16x192xf32>
    %14 = vector.extract_strided_slice %13 {offsets = [0, 0], sizes = [16, 64], strides = [1, 1]} : vector<16x192xf32> to vector<16x64xf32>
    %15 = vector.shape_cast %14 : vector<16x64xf32> to vector<2x8x4x16xf32>
    %16 = tpu.transpose %15, [0, 2, 1, 3] : vector<2x8x4x16xf32> -> vector<2x4x8x16xf32>
    %17 = vector.shape_cast %16 : vector<2x4x8x16xf32> to vector<8x8x16xf32>
    %18 = arith.truncf %17 : vector<8x8x16xf32> to vector<8x8x16xbf16>
    %19 = vector.extract_strided_slice %13 {offsets = [0, 64], sizes = [16, 64], strides = [1, 1]} : vector<16x192xf32> to vector<16x64xf32>
    %20 = vector.shape_cast %19 : vector<16x64xf32> to vector<2x8x4x16xf32>
    %21 = tpu.transpose %20, [0, 2, 1, 3] : vector<2x8x4x16xf32> -> vector<2x4x8x16xf32>
    %22 = vector.shape_cast %21 : vector<2x4x8x16xf32> to vector<8x8x16xf32>
    %23 = arith.truncf %22 : vector<8x8x16xf32> to vector<8x8x16xbf16>
    %24 = vector.extract_strided_slice %13 {offsets = [0, 128], sizes = [16, 64], strides = [1, 1]} : vector<16x192xf32> to vector<16x64xf32>
    %25 = vector.shape_cast %24 : vector<16x64xf32> to vector<2x8x4x16xf32>
    %26 = tpu.transpose %25, [0, 2, 1, 3] : vector<2x8x4x16xf32> -> vector<2x4x8x16xf32>
    %27 = vector.shape_cast %26 : vector<2x4x8x16xf32> to vector<8x8x16xf32>
    %28 = arith.truncf %27 : vector<8x8x16xf32> to vector<8x8x16xbf16>
    "tpu.trace_start"() <{level = 10 : i32, message = "bqd,bkd->bqk"}> : () -> ()
    %cst_11 = arith.constant dense<0.000000e+00> : vector<8x8x8xf32>
    %29 = tpu.matmul %18, %23, %cst_11 {dimension_numbers = #tpu.dot_dimension_numbers<[2], [2], [1], [1], [0, 0, 0, 1, 1, 1], [0], [0]>} : vector<8x8x16xbf16>, vector<8x8x16xbf16>, vector<8x8x8xf32> -> vector<8x8x8xf32>
    "tpu.trace_stop"() : () -> ()
    %30 = vector.shape_cast %29 : vector<8x8x8xf32> to vector<2x4x8x8xf32>
    %31 = vector.shape_cast %5 : vector<2x8xf32> to vector<2x1x1x8xf32>
    %32 = vector.broadcast %31 : vector<2x1x1x8xf32> to vector<2x4x8x8xf32>
    %33 = arith.addf %30, %32 : vector<2x4x8x8xf32>
    %34 = vector.shape_cast %33 : vector<2x4x8x8xf32> to vector<8x8x8xf32>
    %cst_12 = arith.constant dense<0xFF800000> : vector<8x8xf32>
    %35 = vector.multi_reduction <maximumf>, %34, %cst_12 [2] : vector<8x8x8xf32> to vector<8x8xf32>
    %36 = vector.shape_cast %35 : vector<8x8xf32> to vector<8x8x1xf32>
    %37 = vector.broadcast %36 : vector<8x8x1xf32> to vector<8x8x8xf32>
    %38 = arith.subf %34, %37 : vector<8x8x8xf32>
    %39 = math.exp %38 : vector<8x8x8xf32>
    %cst_13 = arith.constant dense<0.000000e+00> : vector<8x8xf32>
    %40 = vector.multi_reduction <add>, %39, %cst_13 [2] : vector<8x8x8xf32> to vector<8x8xf32>
    %41 = vector.shape_cast %40 : vector<8x8xf32> to vector<8x8x1xf32>
    %42 = tpu.reciprocal %41 {approx = true} : vector<8x8x1xf32> -> vector<8x8x1xf32>
    %43 = vector.broadcast %42 : vector<8x8x1xf32> to vector<8x8x8xf32>
    %44 = arith.mulf %39, %43 : vector<8x8x8xf32>
    %45 = arith.truncf %44 : vector<8x8x8xf32> to vector<8x8x8xbf16>
    "tpu.trace_start"() <{level = 10 : i32, message = "bqk,bkd->bqd"}> : () -> ()
    %cst_14 = arith.constant dense<0.000000e+00> : vector<8x8x16xf32>
    %46 = tpu.matmul %45, %28, %cst_14 {dimension_numbers = #tpu.dot_dimension_numbers<[2], [1], [1], [2], [0, 0, 0, 1, 1, 2], [0], [0]>} : vector<8x8x8xbf16>, vector<8x8x16xbf16>, vector<8x8x16xf32> -> vector<8x8x16xf32>
    "tpu.trace_stop"() : () -> ()
    %47 = vector.shape_cast %46 : vector<8x8x16xf32> to vector<2x4x8x16xf32>
    %48 = tpu.transpose %47, [0, 2, 1, 3] : vector<2x4x8x16xf32> -> vector<2x8x4x16xf32>
    %49 = vector.shape_cast %48 : vector<2x8x4x16xf32> to vector<16x64xf32>
    %50 = arith.truncf %49 : vector<16x64xf32> to vector<16x64xbf16>
    %c0_15 = arith.constant 0 : index
    %c0_16 = arith.constant 0 : index
    %c0_17 = arith.constant 0 : index
    %51 = vector.load %arg6[%c0_15, %c0_16, %c0_17] : memref<1x64x64xbf16, #tpu.memory_space<vmem>>, vector<1x64x64xbf16>
    %52 = vector.shape_cast %51 : vector<1x64x64xbf16> to vector<64x64xbf16>
    %cst_18 = arith.constant dense<0.000000e+00> : vector<16x64xf32>
    %53 = tpu.matmul %50, %52, %cst_18 {dimension_numbers = #tpu.dot_dimension_numbers<[1], [0], [0], [1], [0, 0, 1, 1], [], []>} : vector<16x64xbf16>, vector<64x64xbf16>, vector<16x64xf32> -> vector<16x64xf32>
    %c0_19 = arith.constant 0 : index
    %c0_20 = arith.constant 0 : index
    %c0_21 = arith.constant 0 : index
    %54 = vector.load %arg7[%c0_19, %c0_20, %c0_21] : memref<1x1x64xf32, #tpu.memory_space<vmem>>, vector<1x1x64xf32>
    %55 = vector.shape_cast %54 : vector<1x1x64xf32> to vector<1x64xf32>
    %56 = vector.broadcast %55 : vector<1x64xf32> to vector<16x64xf32>
    %57 = arith.addf %53, %56 : vector<16x64xf32>
    %58 = arith.addf %4, %57 : vector<16x64xf32>
    %cst_22 = arith.constant dense<0.000000e+00> : vector<16xf32>
    %59 = vector.multi_reduction <add>, %58, %cst_22 [1] : vector<16x64xf32> to vector<16xf32>
    %60 = vector.shape_cast %59 : vector<16xf32> to vector<16x1xf32>
    %cst_23 = arith.constant 6.400000e+01 : f32
    %61 = vector.broadcast %cst_23 : f32 to vector<16x1xf32>
    %62 = arith.divf %60, %61 : vector<16x1xf32>
    %63 = vector.broadcast %62 : vector<16x1xf32> to vector<16x64xf32>
    %64 = arith.subf %58, %63 : vector<16x64xf32>
    %65 = arith.mulf %64, %64 : vector<16x64xf32>
    %cst_24 = arith.constant dense<0.000000e+00> : vector<16xf32>
    %66 = vector.multi_reduction <add>, %65, %cst_24 [1] : vector<16x64xf32> to vector<16xf32>
    %67 = vector.shape_cast %66 : vector<16xf32> to vector<16x1xf32>
    %cst_25 = arith.constant 6.400000e+01 : f32
    %68 = vector.broadcast %cst_25 : f32 to vector<16x1xf32>
    %69 = arith.divf %67, %68 : vector<16x1xf32>
    %70 = vector.broadcast %62 : vector<16x1xf32> to vector<16x64xf32>
    %71 = arith.subf %58, %70 : vector<16x64xf32>
    %cst_26 = arith.constant 9.99999974E-6 : f32
    %72 = vector.broadcast %cst_26 : f32 to vector<16x1xf32>
    %73 = arith.addf %69, %72 : vector<16x1xf32>
    %74 = math.rsqrt %73 : vector<16x1xf32>
    %75 = vector.broadcast %74 : vector<16x1xf32> to vector<16x64xf32>
    %76 = arith.mulf %71, %75 : vector<16x64xf32>
    %c0_27 = arith.constant 0 : index
    %c0_28 = arith.constant 0 : index
    %c0_29 = arith.constant 0 : index
    %77 = vector.load %arg8[%c0_27, %c0_28, %c0_29] : memref<1x1x64xf32, #tpu.memory_space<vmem>>, vector<1x1x64xf32>
    %78 = vector.shape_cast %77 : vector<1x1x64xf32> to vector<1x64xf32>
    %79 = vector.broadcast %78 : vector<1x64xf32> to vector<16x64xf32>
    %80 = arith.mulf %76, %79 : vector<16x64xf32>
    %c0_30 = arith.constant 0 : index
    %c0_31 = arith.constant 0 : index
    %c0_32 = arith.constant 0 : index
    %81 = vector.load %arg9[%c0_30, %c0_31, %c0_32] : memref<1x1x64xf32, #tpu.memory_space<vmem>>, vector<1x1x64xf32>
    %82 = vector.shape_cast %81 : vector<1x1x64xf32> to vector<1x64xf32>
    %83 = vector.broadcast %82 : vector<1x64xf32> to vector<16x64xf32>
    %84 = arith.addf %80, %83 : vector<16x64xf32>
    %85 = arith.truncf %84 : vector<16x64xf32> to vector<16x64xbf16>
    %c0_33 = arith.constant 0 : index
    %c0_34 = arith.constant 0 : index
    %c0_35 = arith.constant 0 : index
    %86 = vector.load %arg10[%c0_33, %c0_34, %c0_35] : memref<1x64x128xbf16, #tpu.memory_space<vmem>>, vector<1x64x128xbf16>
    %87 = vector.shape_cast %86 : vector<1x64x128xbf16> to vector<64x128xbf16>
    %cst_36 = arith.constant dense<0.000000e+00> : vector<16x128xf32>
    %88 = tpu.matmul %85, %87, %cst_36 {dimension_numbers = #tpu.dot_dimension_numbers<[1], [0], [0], [1], [0, 0, 1, 1], [], []>} : vector<16x64xbf16>, vector<64x128xbf16>, vector<16x128xf32> -> vector<16x128xf32>
    %c0_37 = arith.constant 0 : index
    %c0_38 = arith.constant 0 : index
    %c0_39 = arith.constant 0 : index
    %89 = vector.load %arg11[%c0_37, %c0_38, %c0_39] : memref<1x1x128xf32, #tpu.memory_space<vmem>>, vector<1x1x128xf32>
    %90 = vector.shape_cast %89 : vector<1x1x128xf32> to vector<1x128xf32>
    %91 = vector.broadcast %90 : vector<1x128xf32> to vector<16x128xf32>
    %92 = arith.addf %88, %91 : vector<16x128xf32>
    %cst_40 = arith.constant 0.000000e+00 : f32
    %93 = vector.broadcast %cst_40 : f32 to vector<16x128xf32>
    %94 = arith.maximumf %92, %93 : vector<16x128xf32>
    %95 = arith.truncf %94 : vector<16x128xf32> to vector<16x128xbf16>
    %c0_41 = arith.constant 0 : index
    %c0_42 = arith.constant 0 : index
    %c0_43 = arith.constant 0 : index
    %96 = vector.load %arg12[%c0_41, %c0_42, %c0_43] : memref<1x128x64xbf16, #tpu.memory_space<vmem>>, vector<1x128x64xbf16>
    %97 = vector.shape_cast %96 : vector<1x128x64xbf16> to vector<128x64xbf16>
    %cst_44 = arith.constant dense<0.000000e+00> : vector<16x64xf32>
    %98 = tpu.matmul %95, %97, %cst_44 {dimension_numbers = #tpu.dot_dimension_numbers<[1], [0], [0], [1], [0, 0, 1, 1], [], []>} : vector<16x128xbf16>, vector<128x64xbf16>, vector<16x64xf32> -> vector<16x64xf32>
    %c0_45 = arith.constant 0 : index
    %c0_46 = arith.constant 0 : index
    %c0_47 = arith.constant 0 : index
    %99 = vector.load %arg13[%c0_45, %c0_46, %c0_47] : memref<1x1x64xf32, #tpu.memory_space<vmem>>, vector<1x1x64xf32>
    %100 = vector.shape_cast %99 : vector<1x1x64xf32> to vector<1x64xf32>
    %101 = vector.broadcast %100 : vector<1x64xf32> to vector<16x64xf32>
    %102 = arith.addf %98, %101 : vector<16x64xf32>
    %103 = arith.addf %84, %102 : vector<16x64xf32>
    %cst_48 = arith.constant dense<0.000000e+00> : vector<16xf32>
    %104 = vector.multi_reduction <add>, %103, %cst_48 [1] : vector<16x64xf32> to vector<16xf32>
    %105 = vector.shape_cast %104 : vector<16xf32> to vector<16x1xf32>
    %cst_49 = arith.constant 6.400000e+01 : f32
    %106 = vector.broadcast %cst_49 : f32 to vector<16x1xf32>
    %107 = arith.divf %105, %106 : vector<16x1xf32>
    %108 = vector.broadcast %107 : vector<16x1xf32> to vector<16x64xf32>
    %109 = arith.subf %103, %108 : vector<16x64xf32>
    %110 = arith.mulf %109, %109 : vector<16x64xf32>
    %cst_50 = arith.constant dense<0.000000e+00> : vector<16xf32>
    %111 = vector.multi_reduction <add>, %110, %cst_50 [1] : vector<16x64xf32> to vector<16xf32>
    %112 = vector.shape_cast %111 : vector<16xf32> to vector<16x1xf32>
    %cst_51 = arith.constant 6.400000e+01 : f32
    %113 = vector.broadcast %cst_51 : f32 to vector<16x1xf32>
    %114 = arith.divf %112, %113 : vector<16x1xf32>
    %115 = vector.broadcast %107 : vector<16x1xf32> to vector<16x64xf32>
    %116 = arith.subf %103, %115 : vector<16x64xf32>
    %cst_52 = arith.constant 9.99999974E-6 : f32
    %117 = vector.broadcast %cst_52 : f32 to vector<16x1xf32>
    %118 = arith.addf %114, %117 : vector<16x1xf32>
    %119 = math.rsqrt %118 : vector<16x1xf32>
    %120 = vector.broadcast %119 : vector<16x1xf32> to vector<16x64xf32>
    %121 = arith.mulf %116, %120 : vector<16x64xf32>
    %c0_53 = arith.constant 0 : index
    %c0_54 = arith.constant 0 : index
    %c0_55 = arith.constant 0 : index
    %122 = vector.load %arg14[%c0_53, %c0_54, %c0_55] : memref<1x1x64xf32, #tpu.memory_space<vmem>>, vector<1x1x64xf32>
    %123 = vector.shape_cast %122 : vector<1x1x64xf32> to vector<1x64xf32>
    %124 = vector.broadcast %123 : vector<1x64xf32> to vector<16x64xf32>
    %125 = arith.mulf %121, %124 : vector<16x64xf32>
    %c0_56 = arith.constant 0 : index
    %c0_57 = arith.constant 0 : index
    %c0_58 = arith.constant 0 : index
    %126 = vector.load %arg15[%c0_56, %c0_57, %c0_58] : memref<1x1x64xf32, #tpu.memory_space<vmem>>, vector<1x1x64xf32>
    %127 = vector.shape_cast %126 : vector<1x1x64xf32> to vector<1x64xf32>
    %128 = vector.broadcast %127 : vector<1x64xf32> to vector<16x64xf32>
    %129 = arith.addf %125, %128 : vector<16x64xf32>
    %130 = vector.shape_cast %129 : vector<16x64xf32> to vector<2x8x64xf32>
    %c0_59 = arith.constant 0 : index
    %c0_60 = arith.constant 0 : index
    %c0_61 = arith.constant 0 : index
    %131 = vector.load %arg16[%c0_59, %c0_60, %c0_61] : memref<2x8x64xf32, #tpu.memory_space<vmem>>, vector<2x8x64xf32>
    tpu.vector_store %arg16[%c0_59, %c0_60, %c0_61], %130 {strides = array<i32>} : memref<2x8x64xf32, #tpu.memory_space<vmem>>, vector<2x8x64xf32>,
    return
  }
  func.func @transform_0(%arg0: i32, %arg1: i32) -> (i32, i32, i32) {
    %c0_i32 = arith.constant 0 : i32
    %c0_i32_0 = arith.constant 0 : i32
    %c0_i32_1 = arith.constant 0 : i32
    return %arg0, %c0_i32, %c0_i32_0 : i32, i32, i32
  }
  func.func @transform_1(%arg0: i32, %arg1: i32) -> (i32, i32) {
    %c0_i32 = arith.constant 0 : i32
    %c0_i32_0 = arith.constant 0 : i32
    return %arg0, %c0_i32 : i32, i32
  }
  func.func @transform_2(%arg0: i32, %arg1: i32) -> (i32, i32, i32) {
    %c0_i32 = arith.constant 0 : i32
    %c0_i32_0 = arith.constant 0 : i32
    %c0_i32_1 = arith.constant 0 : i32
    return %arg1, %c0_i32, %c0_i32_0 : i32, i32, i32
  }
  func.func @transform_3(%arg0: i32, %arg1: i32) -> (i32, i32, i32) {
    %c0_i32 = arith.constant 0 : i32
    %c0_i32_0 = arith.constant 0 : i32
    %c0_i32_1 = arith.constant 0 : i32
    return %arg1, %c0_i32, %c0_i32_0 : i32, i32, i32
  }
  func.func @transform_4(%arg0: i32, %arg1: i32) -> (i32, i32, i32) {
    %c0_i32 = arith.constant 0 : i32
    %c0_i32_0 = arith.constant 0 : i32
    %c0_i32_1 = arith.constant 0 : i32
    return %arg1, %c0_i32, %c0_i32_0 : i32, i32, i32
  }
  func.func @transform_5(%arg0: i32, %arg1: i32) -> (i32, i32, i32) {
    %c0_i32 = arith.constant 0 : i32
    %c0_i32_0 = arith.constant 0 : i32
    %c0_i32_1 = arith.constant 0 : i32
    return %arg1, %c0_i32, %c0_i32_0 : i32, i32, i32
  }
  func.func @transform_6(%arg0: i32, %arg1: i32) -> (i32, i32, i32) {
    %c0_i32 = arith.constant 0 : i32
    %c0_i32_0 = arith.constant 0 : i32
    %c0_i32_1 = arith.constant 0 : i32
    return %arg1, %c0_i32, %c0_i32_0 : i32, i32, i32
  }
  func.func @transform_7(%arg0: i32, %arg1: i32) -> (i32, i32, i32) {
    %c0_i32 = arith.constant 0 : i32
    %c0_i32_0 = arith.constant 0 : i32
    %c0_i32_1 = arith.constant 0 : i32
    return %arg1, %c0_i32, %c0_i32_0 : i32, i32, i32
  }
  func.func @transform_8(%arg0: i32, %arg1: i32) -> (i32, i32, i32) {
    %c0_i32 = arith.constant 0 : i32
    %c0_i32_0 = arith.constant 0 : i32
    %c0_i32_1 = arith.constant 0 : i32
    return %arg1, %c0_i32, %c0_i32_0 : i32, i32, i32
  }
  func.func @transform_9(%arg0: i32, %arg1: i32) -> (i32, i32, i32) {
    %c0_i32 = arith.constant 0 : i32
    %c0_i32_0 = arith.constant 0 : i32
    %c0_i32_1 = arith.constant 0 : i32
    return %arg1, %c0_i32, %c0_i32_0 : i32, i32, i32
  }
  func.func @transform_10(%arg0: i32, %arg1: i32) -> (i32, i32, i32) {
    %c0_i32 = arith.constant 0 : i32
    %c0_i32_0 = arith.constant 0 : i32
    %c0_i32_1 = arith.constant 0 : i32
    return %arg1, %c0_i32, %c0_i32_0 : i32, i32, i32
  }
  func.func @transform_11(%arg0: i32, %arg1: i32) -> (i32, i32, i32) {
    %c0_i32 = arith.constant 0 : i32
    %c0_i32_0 = arith.constant 0 : i32
    %c0_i32_1 = arith.constant 0 : i32
    return %arg1, %c0_i32, %c0_i32_0 : i32, i32, i32
  }
  func.func @transform_12(%arg0: i32, %arg1: i32) -> (i32, i32, i32) {
    %c0_i32 = arith.constant 0 : i32
    %c0_i32_0 = arith.constant 0 : i32
    %c0_i32_1 = arith.constant 0 : i32
    return %arg1, %c0_i32, %c0_i32_0 : i32, i32, i32
  }
  func.func @transform_13(%arg0: i32, %arg1: i32) -> (i32, i32, i32) {
    %c0_i32 = arith.constant 0 : i32
    %c0_i32_0 = arith.constant 0 : i32
    %c0_i32_1 = arith.constant 0 : i32
    return %arg1, %c0_i32, %c0_i32_0 : i32, i32, i32
  }
  func.func @transform_14(%arg0: i32, %arg1: i32) -> (i32, i32, i32) {
    %c0_i32 = arith.constant 0 : i32
    %c0_i32_0 = arith.constant 0 : i32
    %c0_i32_1 = arith.constant 0 : i32
    return %arg0, %c0_i32, %c0_i32_0 : i32, i32, i32
  }
}

</mosaic_0001>

<llo_original>
// kernel: tpu_custom_call.1
$region0: #{tpu_custom_call.1}
  #allocation0 [shape = 'u32[]', space=smem, size = 0x4, offset = 0x4, fixed_abs, tag = 'smem constant byte address 0x4 - core index']
  #allocation1 [shape = 'u32[72,128]{1,0:T(1,128)}', space=vmem, size = 0x9000, scoped, tag = 'internal scratch']
  %s0 = inlined_call_operand.hbm [shape: f32[2,8,64], index: 0, kind: input, shape index: {}]
  %s1 = inlined_call_operand.hbm [shape: f32[2,8], index: 1, kind: input, shape index: {}]
  %s2 = inlined_call_operand.vmem [shape: bf16[2,64,192], index: 2, kind: input, shape index: {}]
  %s3 = inlined_call_operand.hbm [shape: f32[2,1,192], index: 3, kind: input, shape index: {}]
  %s4 = inlined_call_operand.vmem [shape: bf16[2,64,64], index: 4, kind: input, shape index: {}]
  %s5 = inlined_call_operand.vmem [shape: f32[2,1,64], index: 5, kind: input, shape index: {}]
  %s6 = inlined_call_operand.vmem [shape: f32[2,1,64], index: 6, kind: input, shape index: {}]
  %s7 = inlined_call_operand.hbm [shape: f32[2,1,64], index: 7, kind: input, shape index: {}]
  %s8 = inlined_call_operand.hbm [shape: bf16[2,64,128], index: 8, kind: input, shape index: {}]
  %s9 = inlined_call_operand.vmem [shape: f32[2,1,128], index: 9, kind: input, shape index: {}]
  %s10 = inlined_call_operand.vmem [shape: bf16[2,128,64], index: 10, kind: input, shape index: {}]
  %s11 = inlined_call_operand.vmem [shape: f32[2,1,64], index: 11, kind: input, shape index: {}]
  %s12 = inlined_call_operand.vmem [shape: f32[2,1,64], index: 12, kind: input, shape index: {}]
  %s13 = inlined_call_operand.hbm [shape: f32[2,1,64], index: 13, kind: input, shape index: {}]
  %s14 = inlined_call_operand.hbm [shape: f32[2,8,64], index: 14, kind: output, shape index: {}]
  %s15 = sld [smem:[#allocation0]]
  $region117: #{tpu_custom_call.1} parent=0
    _
  %s17 = ssub.s32 1, %s15
  %s18 = scalar_select 0, %s17, %s15
  $region1: #{tpu_custom_call.1} parent=0
    #allocation2 [shape = 'u8[8192]{0}', space=vmem, size = 0x2000, scoped, tag = 'input window, operand 0, single buffered']
    #allocation3 [shape = 's32[2]{0}', space=sflag, size = 0x8, scoped, tag = 'scoped memory for tpu_custom_call.1']
    #allocation4 [shape = 's32[2]{0}', space=sflag, size = 0x8, scoped, tag = 'scoped memory for tpu_custom_call.1']
    #allocation5 [shape = 'u8[1024]{0}', space=vmem, size = 0x400, scoped, tag = 'input window, operand 1, single buffered']
    #allocation6 [shape = 's32[1]{0}', space=sflag, size = 0x4, scoped, tag = 'scoped memory for tpu_custom_call.1']
    #allocation7 [shape = 'u8[2048]{0}', space=vmem, size = 0x800, scoped, tag = 'input window, operand 3']
    #allocation8 [shape = 'u8[1024]{0}', space=vmem, size = 0x400, scoped, tag = 'input window, operand 7']
    #allocation9 [shape = 'u8[32768]{0}', space=vmem, size = 0x8000, scoped, tag = 'input window, operand 8']
    #allocation10 [shape = 'u8[1024]{0}', space=vmem, size = 0x400, scoped, tag = 'input window, operand 13']
    #allocation11 [shape = 'u8[8192]{0}', space=vmem, size = 0x2000, scoped, tag = 'output window, operand 0, single buffered']
    %19 = vsyncpa [#allocation3], 0
    %20 = vsyncpa [#allocation6], 0
    %21 = vsyncpa [#allocation4], 0
    loop: start=0, step=1, limit=4
    $region2: #{tpu_custom_call.1} parent=1 // loop_pre_header
      _
    $region3: #{tpu_custom_call.1} parent=1 // loop_header
      %s23 = sphi 0, %s27
      %p24 = scmp.ge.s32.totalorder %s23, 4
      %s30 = sphi 0, %s42
      %s31 = sphi 0, %s38
      %s32 = sphi 0, %s30
      %s33 = sphi 0, %s31
      %s34 = sphi 0, %s32
      %s35 = sphi 0, %s33
      %s45 = sphi 0, %s47
      %s48 = sphi 0, %s45
      %s49 = sphi 0, %s48
      %s65 = sphi 0, %s49
      %s71 = sphi 0, %s73
      %s74 = sphi 0, %s71
      %s75 = sphi 0, %s74
      %s91 = sphi 0, %s75
      %s97 = sphi 0, %s99
      %s100 = sphi 0, %s97
      %s101 = sphi 0, %s100
      %s117 = sphi 0, %s101
      %s123 = sphi 0, %s125
      %s126 = sphi 0, %s123
      %s127 = sphi 0, %s126
      %s143 = sphi 0, %s127
      %s149 = sphi 0, %s151
      %s152 = sphi 0, %s149
      %s153 = sphi 0, %s152
      %s169 = sphi 0, %s153
      %s175 = sphi 0, %s177
      %s178 = sphi 0, %s175
      %s179 = sphi 0, %s178
      %s195 = sphi 0, %s179
      %s201 = sphi 0, %s203
      %s204 = sphi 0, %s201
      %s205 = sphi 0, %s204
      %s221 = sphi 0, %s205
      %s227 = sphi 0, %s229
      %s230 = sphi 0, %s227
      %s231 = sphi 0, %s230
      %s247 = sphi 0, %s231
      %s253 = sphi 0, %s255
      %s256 = sphi 0, %s253
      %s257 = sphi 0, %s256
      %s273 = sphi 0, %s257
      %s279 = sphi 0, %s281
      %s282 = sphi 0, %s279
      %s283 = sphi 0, %s282
      %s299 = sphi 0, %s283
      %s305 = sphi 0, %s307
      %s308 = sphi 0, %s305
      %s309 = sphi 0, %s308
      %s325 = sphi 0, %s309
      %s331 = sphi 0, %s333
      %s334 = sphi 0, %s331
      %s335 = sphi 0, %s334
      %s351 = sphi 0, %s335
      %s357 = sphi 0, %s359
      %s360 = sphi 0, %s357
      %s361 = sphi 0, %s360
      %s377 = sphi 0, %s361
      %s383 = sphi 0, %s385
      %s386 = sphi 0, %s383
      %s387 = sphi 0, %s386
      %s403 = sphi 0, %s387
      %s409 = sphi 0, %s411
      %s412 = sphi 0, %s409
      %s413 = sphi 0, %s412
      %s429 = sphi 0, %s413
    $region4: #{tpu_custom_call.1} parent=1 // loop_header_branch
      %26 = sbr.rel (%p24) target = $region8
    $region5: #{tpu_custom_call.1} parent=1 // loop_body
      %s28 = ssub.s32 %s23, 1
      %s29 = ssub.s32 %s23, 2
      %s36 = sadd.s32 1, %s31
      %p37 = scmp.ge.s32.totalorder %s36, 2
      %s38 = scalar_select %p37, 0, %s36
      %s39 = sadd.s32 1, %s30
      %s40 = scalar_select %p37, %s39, %s30
      %p41 = scmp.ge.s32.totalorder %s40, 1
      %s42 = scalar_select %p41, 0, %s40
      %s43 = ssub.s32 %s30, %s42
      %p44 = scmp.eq.s32.totalorder %s43, 0
      %s46 = sadd.s32 %s45, 1
      %s47 = scalar_select %p44, %s45, %s46
      %p50 = pneg %p44
      %p51 = scmp.eq.s32.totalorder %s23, 1
      %p52 = por %p50, %p51
      %p53 = scmp.ne.s32.totalorder %s45, %s48
      %p54 = scmp.eq.s32.totalorder %s23, 0
      %p55 = por %p53, %p54
      %p56 = scmp.ne.s32.totalorder %s45, %s48
      %p57 = scmp.eq.s32.totalorder %s28, 1
      %p58 = por %p56, %p57
      %p59 = scmp.ne.s32.totalorder %s48, %s49
      %p60 = scmp.eq.s32.totalorder %s28, 0
      %p61 = por %p59, %p60
      %p62 = scmp.ne.s32.totalorder %s48, %s49
      %p63 = scmp.eq.s32.totalorder %s29, 1
      %p64 = por %p62, %p63
      %p66 = scmp.ne.s32.totalorder %s49, %s65
      %p67 = scmp.eq.s32.totalorder %s29, 0
      %p68 = por %p66, %p67
      %s69 = ssub.s32 %s30, %s42
      %p70 = scmp.eq.s32.totalorder %s69, 0
      %s72 = sadd.s32 %s71, 1
      %s73 = scalar_select %p70, %s71, %s72
      %p76 = pneg %p70
      %p77 = scmp.eq.s32.totalorder %s23, 1
      %p78 = por %p76, %p77
      %p79 = scmp.ne.s32.totalorder %s71, %s74
      %p80 = scmp.eq.s32.totalorder %s23, 0
      %p81 = por %p79, %p80
      %p82 = scmp.ne.s32.totalorder %s71, %s74
      %p83 = scmp.eq.s32.totalorder %s28, 1
      %p84 = por %p82, %p83
      %p85 = scmp.ne.s32.totalorder %s74, %s75
      %p86 = scmp.eq.s32.totalorder %s28, 0
      %p87 = por %p85, %p86
      %p88 = scmp.ne.s32.totalorder %s74, %s75
      %p89 = scmp.eq.s32.totalorder %s29, 1
      %p90 = por %p88, %p89
      %p92 = scmp.ne.s32.totalorder %s75, %s91
      %p93 = scmp.eq.s32.totalorder %s29, 0
      %p94 = por %p92, %p93
      %s95 = ssub.s32 %s31, %s38
      %p96 = scmp.eq.s32.totalorder %s95, 0
      %s98 = sadd.s32 %s97, 1
      %s99 = scalar_select %p96, %s97, %s98
      %p102 = pneg %p96
      %p103 = scmp.eq.s32.totalorder %s23, 1
      %p104 = por %p102, %p103
      %p105 = scmp.ne.s32.totalorder %s97, %s100
      %p106 = scmp.eq.s32.totalorder %s23, 0
      %p107 = por %p105, %p106
      %p108 = scmp.ne.s32.totalorder %s97, %s100
      %p109 = scmp.eq.s32.totalorder %s28, 1
      %p110 = por %p108, %p109
      %p111 = scmp.ne.s32.totalorder %s100, %s101
      %p112 = scmp.eq.s32.totalorder %s28, 0
      %p113 = por %p111, %p112
      %p114 = scmp.ne.s32.totalorder %s100, %s101
      %p115 = scmp.eq.s32.totalorder %s29, 1
      %p116 = por %p114, %p115
      %p118 = scmp.ne.s32.totalorder %s101, %s117
      %p119 = scmp.eq.s32.totalorder %s29, 0
      %p120 = por %p118, %p119
      %s121 = ssub.s32 %s31, %s38
      %p122 = scmp.eq.s32.totalorder %s121, 0
      %s124 = sadd.s32 %s123, 1
      %s125 = scalar_select %p122, %s123, %s124
      %p128 = pneg %p122
      %p129 = scmp.eq.s32.totalorder %s23, 1
      %p130 = por %p128, %p129
      %p131 = scmp.ne.s32.totalorder %s123, %s126
      %p132 = scmp.eq.s32.totalorder %s23, 0
      %p133 = por %p131, %p132
      %p134 = scmp.ne.s32.totalorder %s123, %s126
      %p135 = scmp.eq.s32.totalorder %s28, 1
      %p136 = por %p134, %p135
      %p137 = scmp.ne.s32.totalorder %s126, %s127
      %p138 = scmp.eq.s32.totalorder %s28, 0
      %p139 = por %p137, %p138
      %p140 = scmp.ne.s32.totalorder %s126, %s127
      %p141 = scmp.eq.s32.totalorder %s29, 1
      %p142 = por %p140, %p141
      %p144 = scmp.ne.s32.totalorder %s127, %s143
      %p145 = scmp.eq.s32.totalorder %s29, 0
      %p146 = por %p144, %p145
      %s147 = ssub.s32 %s31, %s38
      %p148 = scmp.eq.s32.totalorder %s147, 0
      %s150 = sadd.s32 %s149, 1
      %s151 = scalar_select %p148, %s149, %s150
      %p154 = pneg %p148
      %p155 = scmp.eq.s32.totalorder %s23, 1
      %p156 = por %p154, %p155
      %p157 = scmp.ne.s32.totalorder %s149, %s152
      %p158 = scmp.eq.s32.totalorder %s23, 0
      %p159 = por %p157, %p158
      %p160 = scmp.ne.s32.totalorder %s149, %s152
      %p161 = scmp.eq.s32.totalorder %s28, 1
      %p162 = por %p160, %p161
      %p163 = scmp.ne.s32.totalorder %s152, %s153
      %p164 = scmp.eq.s32.totalorder %s28, 0
      %p165 = por %p163, %p164
      %p166 = scmp.ne.s32.totalorder %s152, %s153
      %p167 = scmp.eq.s32.totalorder %s29, 1
      %p168 = por %p166, %p167
      %p170 = scmp.ne.s32.totalorder %s153, %s169
      %p171 = scmp.eq.s32.totalorder %s29, 0
      %p172 = por %p170, %p171
      %s173 = ssub.s32 %s31, %s38
      %p174 = scmp.eq.s32.totalorder %s173, 0
      %s176 = sadd.s32 %s175, 1
      %s177 = scalar_select %p174, %s175, %s176
      %p180 = pneg %p174
      %p181 = scmp.eq.s32.totalorder %s23, 1
      %p182 = por %p180, %p181
      %p183 = scmp.ne.s32.totalorder %s175, %s178
      %p184 = scmp.eq.s32.totalorder %s23, 0
      %p185 = por %p183, %p184
      %p186 = scmp.ne.s32.totalorder %s175, %s178
      %p187 = scmp.eq.s32.totalorder %s28, 1
      %p188 = por %p186, %p187
      %p189 = scmp.ne.s32.totalorder %s178, %s179
      %p190 = scmp.eq.s32.totalorder %s28, 0
      %p191 = por %p189, %p190
      %p192 = scmp.ne.s32.totalorder %s178, %s179
      %p193 = scmp.eq.s32.totalorder %s29, 1
      %p194 = por %p192, %p193
      %p196 = scmp.ne.s32.totalorder %s179, %s195
      %p197 = scmp.eq.s32.totalorder %s29, 0
      %p198 = por %p196, %p197
      %s199 = ssub.s32 %s31, %s38
      %p200 = scmp.eq.s32.totalorder %s199, 0
      %s202 = sadd.s32 %s201, 1
      %s203 = scalar_select %p200, %s201, %s202
      %p206 = pneg %p200
      %p207 = scmp.eq.s32.totalorder %s23, 1
      %p208 = por %p206, %p207
      %p209 = scmp.ne.s32.totalorder %s201, %s204
      %p210 = scmp.eq.s32.totalorder %s23, 0
      %p211 = por %p209, %p210
      %p212 = scmp.ne.s32.totalorder %s201, %s204
      %p213 = scmp.eq.s32.totalorder %s28, 1
      %p214 = por %p212, %p213
      %p215 = scmp.ne.s32.totalorder %s204, %s205
      %p216 = scmp.eq.s32.totalorder %s28, 0
      %p217 = por %p215, %p216
      %p218 = scmp.ne.s32.totalorder %s204, %s205
      %p219 = scmp.eq.s32.totalorder %s29, 1
      %p220 = por %p218, %p219
      %p222 = scmp.ne.s32.totalorder %s205, %s221
      %p223 = scmp.eq.s32.totalorder %s29, 0
      %p224 = por %p222, %p223
      %s225 = ssub.s32 %s31, %s38
      %p226 = scmp.eq.s32.totalorder %s225, 0
      %s228 = sadd.s32 %s227, 1
      %s229 = scalar_select %p226, %s227, %s228
      %p232 = pneg %p226
      %p233 = scmp.eq.s32.totalorder %s23, 1
      %p234 = por %p232, %p233
      %p235 = scmp.ne.s32.totalorder %s227, %s230
      %p236 = scmp.eq.s32.totalorder %s23, 0
      %p237 = por %p235, %p236
      %p238 = scmp.ne.s32.totalorder %s227, %s230
      %p239 = scmp.eq.s32.totalorder %s28, 1
      %p240 = por %p238, %p239
      %p241 = scmp.ne.s32.totalorder %s230, %s231
      %p242 = scmp.eq.s32.totalorder %s28, 0
      %p243 = por %p241, %p242
      %p244 = scmp.ne.s32.totalorder %s230, %s231
      %p245 = scmp.eq.s32.totalorder %s29, 1
      %p246 = por %p244, %p245
      %p248 = scmp.ne.s32.totalorder %s231, %s247
      %p249 = scmp.eq.s32.totalorder %s29, 0
      %p250 = por %p248, %p249
      %s251 = ssub.s32 %s31, %s38
      %p252 = scmp.eq.s32.totalorder %s251, 0
      %s254 = sadd.s32 %s253, 1
      %s255 = scalar_select %p252, %s253, %s254
      %p258 = pneg %p252
      %p259 = scmp.eq.s32.totalorder %s23, 1
      %p260 = por %p258, %p259
      %p261 = scmp.ne.s32.totalorder %s253, %s256
      %p262 = scmp.eq.s32.totalorder %s23, 0
      %p263 = por %p261, %p262
      %p264 = scmp.ne.s32.totalorder %s253, %s256
      %p265 = scmp.eq.s32.totalorder %s28, 1
      %p266 = por %p264, %p265
      %p267 = scmp.ne.s32.totalorder %s256, %s257
      %p268 = scmp.eq.s32.totalorder %s28, 0
      %p269 = por %p267, %p268
      %p270 = scmp.ne.s32.totalorder %s256, %s257
      %p271 = scmp.eq.s32.totalorder %s29, 1
      %p272 = por %p270, %p271
      %p274 = scmp.ne.s32.totalorder %s257, %s273
      %p275 = scmp.eq.s32.totalorder %s29, 0
      %p276 = por %p274, %p275
      %s277 = ssub.s32 %s31, %s38
      %p278 = scmp.eq.s32.totalorder %s277, 0
      %s280 = sadd.s32 %s279, 1
      %s281 = scalar_select %p278, %s279, %s280
      %p284 = pneg %p278
      %p285 = scmp.eq.s32.totalorder %s23, 1
      %p286 = por %p284, %p285
      %p287 = scmp.ne.s32.totalorder %s279, %s282
      %p288 = scmp.eq.s32.totalorder %s23, 0
      %p289 = por %p287, %p288
      %p290 = scmp.ne.s32.totalorder %s279, %s282
      %p291 = scmp.eq.s32.totalorder %s28, 1
      %p292 = por %p290, %p291
      %p293 = scmp.ne.s32.totalorder %s282, %s283
      %p294 = scmp.eq.s32.totalorder %s28, 0
      %p295 = por %p293, %p294
      %p296 = scmp.ne.s32.totalorder %s282, %s283
      %p297 = scmp.eq.s32.totalorder %s29, 1
      %p298 = por %p296, %p297
      %p300 = scmp.ne.s32.totalorder %s283, %s299
      %p301 = scmp.eq.s32.totalorder %s29, 0
      %p302 = por %p300, %p301
      %s303 = ssub.s32 %s31, %s38
      %p304 = scmp.eq.s32.totalorder %s303, 0
      %s306 = sadd.s32 %s305, 1
      %s307 = scalar_select %p304, %s305, %s306
      %p310 = pneg %p304
      %p311 = scmp.eq.s32.totalorder %s23, 1
      %p312 = por %p310, %p311
      %p313 = scmp.ne.s32.totalorder %s305, %s308
      %p314 = scmp.eq.s32.totalorder %s23, 0
      %p315 = por %p313, %p314
      %p316 = scmp.ne.s32.totalorder %s305, %s308
      %p317 = scmp.eq.s32.totalorder %s28, 1
      %p318 = por %p316, %p317
      %p319 = scmp.ne.s32.totalorder %s308, %s309
      %p320 = scmp.eq.s32.totalorder %s28, 0
      %p321 = por %p319, %p320
      %p322 = scmp.ne.s32.totalorder %s308, %s309
      %p323 = scmp.eq.s32.totalorder %s29, 1
      %p324 = por %p322, %p323
      %p326 = scmp.ne.s32.totalorder %s309, %s325
      %p327 = scmp.eq.s32.totalorder %s29, 0
      %p328 = por %p326, %p327
      %s329 = ssub.s32 %s31, %s38
      %p330 = scmp.eq.s32.totalorder %s329, 0
      %s332 = sadd.s32 %s331, 1
      %s333 = scalar_select %p330, %s331, %s332
      %p336 = pneg %p330
      %p337 = scmp.eq.s32.totalorder %s23, 1
      %p338 = por %p336, %p337
      %p339 = scmp.ne.s32.totalorder %s331, %s334
      %p340 = scmp.eq.s32.totalorder %s23, 0
      %p341 = por %p339, %p340
      %p342 = scmp.ne.s32.totalorder %s331, %s334
      %p343 = scmp.eq.s32.totalorder %s28, 1
      %p344 = por %p342, %p343
      %p345 = scmp.ne.s32.totalorder %s334, %s335
      %p346 = scmp.eq.s32.totalorder %s28, 0
      %p347 = por %p345, %p346
      %p348 = scmp.ne.s32.totalorder %s334, %s335
      %p349 = scmp.eq.s32.totalorder %s29, 1
      %p350 = por %p348, %p349
      %p352 = scmp.ne.s32.totalorder %s335, %s351
      %p353 = scmp.eq.s32.totalorder %s29, 0
      %p354 = por %p352, %p353
      %s355 = ssub.s32 %s31, %s38
      %p356 = scmp.eq.s32.totalorder %s355, 0
      %s358 = sadd.s32 %s357, 1
      %s359 = scalar_select %p356, %s357, %s358
      %p362 = pneg %p356
      %p363 = scmp.eq.s32.totalorder %s23, 1
      %p364 = por %p362, %p363
      %p365 = scmp.ne.s32.totalorder %s357, %s360
      %p366 = scmp.eq.s32.totalorder %s23, 0
      %p367 = por %p365, %p366
      %p368 = scmp.ne.s32.totalorder %s357, %s360
      %p369 = scmp.eq.s32.totalorder %s28, 1
      %p370 = por %p368, %p369
      %p371 = scmp.ne.s32.totalorder %s360, %s361
      %p372 = scmp.eq.s32.totalorder %s28, 0
      %p373 = por %p371, %p372
      %p374 = scmp.ne.s32.totalorder %s360, %s361
      %p375 = scmp.eq.s32.totalorder %s29, 1
      %p376 = por %p374, %p375
      %p378 = scmp.ne.s32.totalorder %s361, %s377
      %p379 = scmp.eq.s32.totalorder %s29, 0
      %p380 = por %p378, %p379
      %s381 = ssub.s32 %s31, %s38
      %p382 = scmp.eq.s32.totalorder %s381, 0
      %s384 = sadd.s32 %s383, 1
      %s385 = scalar_select %p382, %s383, %s384
      %p388 = pneg %p382
      %p389 = scmp.eq.s32.totalorder %s23, 1
      %p390 = por %p388, %p389
      %p391 = scmp.ne.s32.totalorder %s383, %s386
      %p392 = scmp.eq.s32.totalorder %s23, 0
      %p393 = por %p391, %p392
      %p394 = scmp.ne.s32.totalorder %s383, %s386
      %p395 = scmp.eq.s32.totalorder %s28, 1
      %p396 = por %p394, %p395
      %p397 = scmp.ne.s32.totalorder %s386, %s387
      %p398 = scmp.eq.s32.totalorder %s28, 0
      %p399 = por %p397, %p398
      %p400 = scmp.ne.s32.totalorder %s386, %s387
      %p401 = scmp.eq.s32.totalorder %s29, 1
      %p402 = por %p400, %p401
      %p404 = scmp.ne.s32.totalorder %s387, %s403
      %p405 = scmp.eq.s32.totalorder %s29, 0
      %p406 = por %p404, %p405
      %s407 = ssub.s32 %s30, %s42
      %p408 = scmp.eq.s32.totalorder %s407, 0
      %s410 = sadd.s32 %s409, 1
      %s411 = scalar_select %p408, %s409, %s410
      %p414 = pneg %p408
      %p415 = scmp.eq.s32.totalorder %s23, 1
      %p416 = por %p414, %p415
      %p417 = scmp.ne.s32.totalorder %s409, %s412
      %p418 = scmp.eq.s32.totalorder %s23, 0
      %p419 = por %p417, %p418
      %p420 = scmp.ne.s32.totalorder %s409, %s412
      %p421 = scmp.eq.s32.totalorder %s28, 1
      %p422 = por %p420, %p421
      %p423 = scmp.ne.s32.totalorder %s412, %s413
      %p424 = scmp.eq.s32.totalorder %s28, 0
      %p425 = por %p423, %p424
      %p426 = scmp.ne.s32.totalorder %s412, %s413
      %p427 = scmp.eq.s32.totalorder %s29, 1
      %p428 = por %p426, %p427
      %p430 = scmp.ne.s32.totalorder %s413, %s429
      %p431 = scmp.eq.s32.totalorder %s29, 0
      %p432 = por %p430, %p431
      %p433 = scmp.le.s32.totalorder 1, %s23
      %p434 = scmp.lt.s32.totalorder %s23, 3
      %p435 = pnand %p433, %p434
      %p436 = pneg %p435
      // Predicated region
      $region9: #{tpu_custom_call.1} parent=5 // pred_check
        _
      $region10: #{tpu_custom_call.1} parent=5 // pred_check_branch
        %438 = sbr.rel (%p435) target = $region12
      $region11: #{tpu_custom_call.1} parent=5 // pred_region
        %s439 = ssub.s32 %s23, 1
        // Predicated region
        $region13: #{tpu_custom_call.1} parent=11 // pred_check
          %p440 = pneg %p61
        $region14: #{tpu_custom_call.1} parent=11 // pred_check_branch
          %442 = sbr.rel (%p440) target = $region16
        $region15: #{tpu_custom_call.1} parent=11 // pred_region
          %s443 = smul.u32 2, %s32
          %445 = vsyncadd [#allocation3], 0
          %s446 = smul.addr %s443, 8
          %s447 = scalar_lea.hbm %s0, %s446
          %s448 = sshll.u32 %s447, 4
          %s449 = int_to_ptr.hbm [resolvable:$true] %s448
          %s450 = sshll.u32 [#allocation2], 4
          %s451 = int_to_ptr.vmem [resolvable:$true] %s450
          %456 = dma.hbm_to_vmem [thread:$0]  %s449, 256, %s451, [#allocation3], 128, 128, 8
        $region16: #{tpu_custom_call.1} parent=11 // pred_fallthru
          _
        // Predicated region
        $region17: #{tpu_custom_call.1} parent=11 // pred_check
          %p457 = pneg %p87
        $region18: #{tpu_custom_call.1} parent=11 // pred_check_branch
          %459 = sbr.rel (%p457) target = $region20
        $region19: #{tpu_custom_call.1} parent=11 // pred_region
          %461 = vsyncadd [#allocation6], 0
          %s462 = smul.addr %s32, 2
          %s463 = scalar_lea.hbm %s1, %s462
          %s465 = sshll.u32 %s463, 4
          %s466 = int_to_ptr.hbm [resolvable:$true] %s465
          %s467 = sshll.u32 [#allocation5], 4
          %s468 = int_to_ptr.vmem [resolvable:$true] %s467
          %470 = dma.hbm_to_vmem [thread:$0]  %s466, 32, %s468, [#allocation6]
        $region20: #{tpu_custom_call.1} parent=11 // pred_fallthru
          _
      $region12: #{tpu_custom_call.1} parent=5 // pred_fallthru
        _
      %p471 = scmp.lt.s32.totalorder %s23, 2
      // Predicated region
      $region21: #{tpu_custom_call.1} parent=5 // pred_check
        %p472 = pneg %p471
      $region22: #{tpu_custom_call.1} parent=5 // pred_check_branch
        %474 = sbr.rel (%p472) target = $region24
      $region23: #{tpu_custom_call.1} parent=5 // pred_region
        // Predicated region
        $region25: #{tpu_custom_call.1} parent=23 // pred_check
          %p475 = pneg %p107
        $region26: #{tpu_custom_call.1} parent=23 // pred_check_branch
          %477 = sbr.rel (%p475) target = $region28
        $region27: #{tpu_custom_call.1} parent=23 // pred_region
          %p478 = scmp.lt.s32.totalorder %s31, 1
          %s479 = scalar_select %p478, %s31, 1
          %s480 = smul.addr %s479, 16
          %s481 = smul.addr %s480, 4
          %s482 = scalar_lea.vmem %s2, %s481
        $region28: #{tpu_custom_call.1} parent=23 // pred_fallthru
          _
        // Predicated region
        $region29: #{tpu_custom_call.1} parent=23 // pred_check
          %p483 = pneg %p133
        $region30: #{tpu_custom_call.1} parent=23 // pred_check_branch
          %485 = sbr.rel (%p483) target = $region32
        $region31: #{tpu_custom_call.1} parent=23 // pred_region
          %s486 = sand.u32 %s23, 1
          %s487 = scalar_lea.sflag [#allocation3], %s486
          %s488 = sand.u32 %s123, 1
          %s489 = smul.addr %s488, 2
          %s490 = scalar_lea.vmem [#allocation7], %s489
          %492 = vsyncadd %s487, 0
          %s493 = smul.addr %s31, 2
          %s494 = scalar_lea.hbm %s3, %s493
          %s496 = sshll.u32 %s494, 4
          %s497 = int_to_ptr.hbm [resolvable:$true] %s496
          %s498 = sshll.u32 %s490, 4
          %s499 = int_to_ptr.vmem [resolvable:$true] %s498
          %501 = dma.hbm_to_vmem [thread:$0]  %s497, 32, %s499, %s487
        $region32: #{tpu_custom_call.1} parent=23 // pred_fallthru
          _
        // Predicated region
        $region33: #{tpu_custom_call.1} parent=23 // pred_check
          %p502 = pneg %p159
        $region34: #{tpu_custom_call.1} parent=23 // pred_check_branch
          %504 = sbr.rel (%p502) target = $region36
        $region35: #{tpu_custom_call.1} parent=23 // pred_region
          %p505 = scmp.lt.s32.totalorder %s31, 1
          %s506 = scalar_select %p505, %s31, 1
          %s507 = smul.addr %s506, 8
          %s508 = smul.addr %s507, 4
          %s509 = scalar_lea.vmem %s4, %s508
        $region36: #{tpu_custom_call.1} parent=23 // pred_fallthru
          _
        // Predicated region
        $region37: #{tpu_custom_call.1} parent=23 // pred_check
          %p510 = pneg %p185
        $region38: #{tpu_custom_call.1} parent=23 // pred_check_branch
          %512 = sbr.rel (%p510) target = $region40
        $region39: #{tpu_custom_call.1} parent=23 // pred_region
          %p513 = scmp.lt.s32.totalorder %s31, 1
          %s514 = scalar_select %p513, %s31, 1
          %s515 = scalar_lea.vmem %s5, %s514
        $region40: #{tpu_custom_call.1} parent=23 // pred_fallthru
          _
        // Predicated region
        $region41: #{tpu_custom_call.1} parent=23 // pred_check
          %p516 = pneg %p211
        $region42: #{tpu_custom_call.1} parent=23 // pred_check_branch
          %518 = sbr.rel (%p516) target = $region44
        $region43: #{tpu_custom_call.1} parent=23 // pred_region
          %p519 = scmp.lt.s32.totalorder %s31, 1
          %s520 = scalar_select %p519, %s31, 1
          %s521 = scalar_lea.vmem %s6, %s520
        $region44: #{tpu_custom_call.1} parent=23 // pred_fallthru
          _
        // Predicated region
        $region45: #{tpu_custom_call.1} parent=23 // pred_check
          %p522 = pneg %p237
        $region46: #{tpu_custom_call.1} parent=23 // pred_check_branch
          %524 = sbr.rel (%p522) target = $region48
        $region47: #{tpu_custom_call.1} parent=23 // pred_region
          %s525 = sand.u32 %s23, 1
          %s526 = scalar_lea.sflag [#allocation3], %s525
          %s527 = sand.u32 %s227, 1
          %s528 = scalar_lea.vmem [#allocation8], %s527
          %530 = vsyncadd %s526, 0
          %s531 = scalar_lea.hbm %s7, %s31
          %s533 = sshll.u32 %s531, 4
          %s534 = int_to_ptr.hbm [resolvable:$true] %s533
          %s535 = sshll.u32 %s528, 4
          %s536 = int_to_ptr.vmem [resolvable:$true] %s535
          %538 = dma.hbm_to_vmem [thread:$0]  %s534, 16, %s536, %s526
        $region48: #{tpu_custom_call.1} parent=23 // pred_fallthru
          _
        // Predicated region
        $region49: #{tpu_custom_call.1} parent=23 // pred_check
          %p539 = pneg %p263
        $region50: #{tpu_custom_call.1} parent=23 // pred_check_branch
          %541 = sbr.rel (%p539) target = $region52
        $region51: #{tpu_custom_call.1} parent=23 // pred_region
          %s542 = sand.u32 %s23, 1
          %s543 = scalar_lea.sflag [#allocation3], %s542
          %s544 = sand.u32 %s253, 1
          %s545 = smul.addr %s544, 32
          %s546 = scalar_lea.vmem [#allocation9], %s545
          %548 = vsyncadd %s543, 0
          %s549 = smul.addr %s31, 8
          %s550 = smul.addr %s549, 4
          %s551 = scalar_lea.hbm %s8, %s550
          %s552 = sshll.u32 %s551, 4
          %s553 = int_to_ptr.hbm [resolvable:$true] %s552
          %s554 = sshll.u32 %s546, 4
          %s555 = int_to_ptr.vmem [resolvable:$true] %s554
          %560 = dma.hbm_to_vmem [thread:$0]  %s553, 512, %s555, %s543, 64, 64, 4
        $region52: #{tpu_custom_call.1} parent=23 // pred_fallthru
          _
        // Predicated region
        $region53: #{tpu_custom_call.1} parent=23 // pred_check
          %p561 = pneg %p289
        $region54: #{tpu_custom_call.1} parent=23 // pred_check_branch
          %563 = sbr.rel (%p561) target = $region56
        $region55: #{tpu_custom_call.1} parent=23 // pred_region
          %p564 = scmp.lt.s32.totalorder %s31, 1
          %s565 = scalar_select %p564, %s31, 1
          %s566 = scalar_lea.vmem %s9, %s565
        $region56: #{tpu_custom_call.1} parent=23 // pred_fallthru
          _
        // Predicated region
        $region57: #{tpu_custom_call.1} parent=23 // pred_check
          %p567 = pneg %p315
        $region58: #{tpu_custom_call.1} parent=23 // pred_check_branch
          %569 = sbr.rel (%p567) target = $region60
        $region59: #{tpu_custom_call.1} parent=23 // pred_region
          %p570 = scmp.lt.s32.totalorder %s31, 1
          %s571 = scalar_select %p570, %s31, 1
          %s572 = smul.addr %s571, 16
          %s573 = smul.addr %s572, 4
          %s574 = scalar_lea.vmem %s10, %s573
        $region60: #{tpu_custom_call.1} parent=23 // pred_fallthru
          _
        // Predicated region
        $region61: #{tpu_custom_call.1} parent=23 // pred_check
          %p575 = pneg %p341
        $region62: #{tpu_custom_call.1} parent=23 // pred_check_branch
          %577 = sbr.rel (%p575) target = $region64
        $region63: #{tpu_custom_call.1} parent=23 // pred_region
          %p578 = scmp.lt.s32.totalorder %s31, 1
          %s579 = scalar_select %p578, %s31, 1
          %s580 = scalar_lea.vmem %s11, %s579
        $region64: #{tpu_custom_call.1} parent=23 // pred_fallthru
          _
        // Predicated region
        $region65: #{tpu_custom_call.1} parent=23 // pred_check
          %p581 = pneg %p367
        $region66: #{tpu_custom_call.1} parent=23 // pred_check_branch
          %583 = sbr.rel (%p581) target = $region68
        $region67: #{tpu_custom_call.1} parent=23 // pred_region
          %p584 = scmp.lt.s32.totalorder %s31, 1
          %s585 = scalar_select %p584, %s31, 1
          %s586 = scalar_lea.vmem %s12, %s585
        $region68: #{tpu_custom_call.1} parent=23 // pred_fallthru
          _
        // Predicated region
        $region69: #{tpu_custom_call.1} parent=23 // pred_check
          %p587 = pneg %p393
        $region70: #{tpu_custom_call.1} parent=23 // pred_check_branch
          %589 = sbr.rel (%p587) target = $region72
        $region71: #{tpu_custom_call.1} parent=23 // pred_region
          %s590 = sand.u32 %s23, 1
          %s591 = scalar_lea.sflag [#allocation3], %s590
          %s592 = sand.u32 %s383, 1
          %s593 = scalar_lea.vmem [#allocation10], %s592
          %595 = vsyncadd %s591, 0
          %s596 = scalar_lea.hbm %s13, %s31
          %s598 = sshll.u32 %s596, 4
          %s599 = int_to_ptr.hbm [resolvable:$true] %s598
          %s600 = sshll.u32 %s593, 4
          %s601 = int_to_ptr.vmem [resolvable:$true] %s600
          %603 = dma.hbm_to_vmem [thread:$0]  %s599, 16, %s601, %s591
        $region72: #{tpu_custom_call.1} parent=23 // pred_fallthru
          _
      $region24: #{tpu_custom_call.1} parent=5 // pred_fallthru
        _
      %p604 = scmp.le.s32.totalorder 1, %s23
      %p605 = scmp.lt.s32.totalorder %s23, 3
      %p606 = pnand %p604, %p605
      %p607 = pneg %p606
      // Predicated region
      $region73: #{tpu_custom_call.1} parent=5 // pred_check
        _
      $region74: #{tpu_custom_call.1} parent=5 // pred_check_branch
        %609 = sbr.rel (%p606) target = $region76
      $region75: #{tpu_custom_call.1} parent=5 // pred_region
        %s610 = ssub.s32 %s23, 1
        // Predicated region
        $region77: #{tpu_custom_call.1} parent=75 // pred_check
          %p611 = pneg %p61
        $region78: #{tpu_custom_call.1} parent=75 // pred_check_branch
          %613 = sbr.rel (%p611) target = $region80
        $region79: #{tpu_custom_call.1} parent=75 // pred_region
          %615 = dma.done [#allocation3], 256
        $region80: #{tpu_custom_call.1} parent=75 // pred_fallthru
          _
        // Predicated region
        $region81: #{tpu_custom_call.1} parent=75 // pred_check
          %p616 = pneg %p87
        $region82: #{tpu_custom_call.1} parent=75 // pred_check_branch
          %618 = sbr.rel (%p616) target = $region84
        $region83: #{tpu_custom_call.1} parent=75 // pred_region
          %620 = dma.done [#allocation6], 32
        $region84: #{tpu_custom_call.1} parent=75 // pred_fallthru
          _
        %s621 = sand.u32 %s28, 1
        %s622 = scalar_lea.sflag [#allocation3], %s621
        %s623 = sand.u32 %s126, 1
        %s624 = smul.addr %s623, 2
        %s625 = scalar_lea.vmem [#allocation7], %s624
        // Predicated region
        $region85: #{tpu_custom_call.1} parent=75 // pred_check
          %p626 = pneg %p139
        $region86: #{tpu_custom_call.1} parent=75 // pred_check_branch
          %628 = sbr.rel (%p626) target = $region88
        $region87: #{tpu_custom_call.1} parent=75 // pred_region
          %630 = dma.done %s622, 32
        $region88: #{tpu_custom_call.1} parent=75 // pred_fallthru
          _
        %s631 = sand.u32 %s28, 1
        %s632 = scalar_lea.sflag [#allocation3], %s631
        %s633 = sand.u32 %s230, 1
        %s634 = scalar_lea.vmem [#allocation8], %s633
        // Predicated region
        $region89: #{tpu_custom_call.1} parent=75 // pred_check
          %p635 = pneg %p243
        $region90: #{tpu_custom_call.1} parent=75 // pred_check_branch
          %637 = sbr.rel (%p635) target = $region92
        $region91: #{tpu_custom_call.1} parent=75 // pred_region
          %639 = dma.done %s632, 16
        $region92: #{tpu_custom_call.1} parent=75 // pred_fallthru
          _
        %s640 = sand.u32 %s28, 1
        %s641 = scalar_lea.sflag [#allocation3], %s640
        %s642 = sand.u32 %s256, 1
        %s643 = smul.addr %s642, 32
        %s644 = scalar_lea.vmem [#allocation9], %s643
        // Predicated region
        $region93: #{tpu_custom_call.1} parent=75 // pred_check
          %p645 = pneg %p269
        $region94: #{tpu_custom_call.1} parent=75 // pred_check_branch
          %647 = sbr.rel (%p645) target = $region96
        $region95: #{tpu_custom_call.1} parent=75 // pred_region
          %649 = dma.done %s641, 512
        $region96: #{tpu_custom_call.1} parent=75 // pred_fallthru
          _
        %s650 = sand.u32 %s28, 1
        %s651 = scalar_lea.sflag [#allocation3], %s650
        %s652 = sand.u32 %s386, 1
        %s653 = scalar_lea.vmem [#allocation10], %s652
        // Predicated region
        $region97: #{tpu_custom_call.1} parent=75 // pred_check
          %p654 = pneg %p399
        $region98: #{tpu_custom_call.1} parent=75 // pred_check_branch
          %656 = sbr.rel (%p654) target = $region100
        $region99: #{tpu_custom_call.1} parent=75 // pred_region
          %658 = dma.done %s651, 16
        $region100: #{tpu_custom_call.1} parent=75 // pred_fallthru
          _
        %p659 = pneg %p61
        %p660 = pneg %p58
        %p661 = pneg %p87
        %p662 = pneg %p84
        %p663 = scmp.lt.s32.totalorder %s33, 1
        %s664 = scalar_select %p663, %s33, 1
        %s665 = smul.addr %s664, 16
        %s666 = smul.addr %s665, 4
        %s667 = scalar_lea.vmem %s2, %s666
        %p668 = pneg %p113
        %p669 = pneg %p110
        %s670 = sand.u32 %s28, 1
        %s671 = scalar_lea.sflag [#allocation3], %s670
        %s672 = sand.u32 %s126, 1
        %s673 = smul.addr %s672, 2
        %s674 = scalar_lea.vmem [#allocation7], %s673
        %p675 = pneg %p139
        %p676 = pneg %p136
        %p677 = scmp.lt.s32.totalorder %s33, 1
        %s678 = scalar_select %p677, %s33, 1
        %s679 = smul.addr %s678, 8
        %s680 = smul.addr %s679, 4
        %s681 = scalar_lea.vmem %s4, %s680
        %p682 = pneg %p165
        %p683 = pneg %p162
        %p684 = scmp.lt.s32.totalorder %s33, 1
        %s685 = scalar_select %p684, %s33, 1
        %s686 = scalar_lea.vmem %s5, %s685
        %p687 = pneg %p191
        %p688 = pneg %p188
        %p689 = scmp.lt.s32.totalorder %s33, 1
        %s690 = scalar_select %p689, %s33, 1
        %s691 = scalar_lea.vmem %s6, %s690
        %p692 = pneg %p217
        %p693 = pneg %p214
        %s694 = sand.u32 %s28, 1
        %s695 = scalar_lea.sflag [#allocation3], %s694
        %s696 = sand.u32 %s230, 1
        %s697 = scalar_lea.vmem [#allocation8], %s696
        %p698 = pneg %p243
        %p699 = pneg %p240
        %s700 = sand.u32 %s28, 1
        %s701 = scalar_lea.sflag [#allocation3], %s700
        %s702 = sand.u32 %s256, 1
        %s703 = smul.addr %s702, 32
        %s704 = scalar_lea.vmem [#allocation9], %s703
        %p705 = pneg %p269
        %p706 = pneg %p266
        %p707 = scmp.lt.s32.totalorder %s33, 1
        %s708 = scalar_select %p707, %s33, 1
        %s709 = scalar_lea.vmem %s9, %s708
        %p710 = pneg %p295
        %p711 = pneg %p292
        %p712 = scmp.lt.s32.totalorder %s33, 1
        %s713 = scalar_select %p712, %s33, 1
        %s714 = smul.addr %s713, 16
        %s715 = smul.addr %s714, 4
        %s716 = scalar_lea.vmem %s10, %s715
        %p717 = pneg %p321
        %p718 = pneg %p318
        %p719 = scmp.lt.s32.totalorder %s33, 1
        %s720 = scalar_select %p719, %s33, 1
        %s721 = scalar_lea.vmem %s11, %s720
        %p722 = pneg %p347
        %p723 = pneg %p344
        %p724 = scmp.lt.s32.totalorder %s33, 1
        %s725 = scalar_select %p724, %s33, 1
        %s726 = scalar_lea.vmem %s12, %s725
        %p727 = pneg %p373
        %p728 = pneg %p370
        %s729 = sand.u32 %s28, 1
        %s730 = scalar_lea.sflag [#allocation3], %s729
        %s731 = sand.u32 %s386, 1
        %s732 = scalar_lea.vmem [#allocation10], %s731
        %p733 = pneg %p399
        %p734 = pneg %p396
        %p735 = pneg %p425
        %p736 = pneg %p422
        %s737 = smul.u32 2, %s32
        %p738 = scmp.lt.s32.totalorder %s33, 1
        %s739 = scalar_select %p738, %s33, 1
        %s740 = smul.addr %s739, 16
        %s741 = smul.addr %s740, 4
        %s742 = scalar_lea.vmem %s2, %s741
        %p743 = scmp.lt.s32.totalorder %s33, 1
        %s744 = scalar_select %p743, %s33, 1
        %s745 = smul.addr %s744, 8
        %s746 = smul.addr %s745, 4
        %s747 = scalar_lea.vmem %s4, %s746
        %p748 = scmp.lt.s32.totalorder %s33, 1
        %s749 = scalar_select %p748, %s33, 1
        %s750 = scalar_lea.vmem %s5, %s749
        %p751 = scmp.lt.s32.totalorder %s33, 1
        %s752 = scalar_select %p751, %s33, 1
        %s753 = scalar_lea.vmem %s6, %s752
        %p754 = scmp.lt.s32.totalorder %s33, 1
        %s755 = scalar_select %p754, %s33, 1
        %s756 = scalar_lea.vmem %s9, %s755
        %p757 = scmp.lt.s32.totalorder %s33, 1
        %s758 = scalar_select %p757, %s33, 1
        %s759 = smul.addr %s758, 16
        %s760 = smul.addr %s759, 4
        %s761 = scalar_lea.vmem %s10, %s760
        %p762 = scmp.lt.s32.totalorder %s33, 1
        %s763 = scalar_select %p762, %s33, 1
        %s764 = scalar_lea.vmem %s11, %s763
        %p765 = scmp.lt.s32.totalorder %s33, 1
        %s766 = scalar_select %p765, %s33, 1
        %s767 = scalar_lea.vmem %s12, %s766
        %s768 = smul.u32 2, %s32
        %p770 = scmp.eq.s32.totalorder %s33, 0
        // Predicated region
        $region101: #{tpu_custom_call.1} parent=75 // pred_check
          %p771 = pneg %p770
        $region102: #{tpu_custom_call.1} parent=75 // pred_check_branch
          %773 = sbr.rel (%p771) target = $region104
        $region103: #{tpu_custom_call.1} parent=75 // pred_region
          %v774 = vld [vmem:[#allocation2] sm:$0xff]
          %v775 = vld [vmem:[#allocation2 + $0x8] sm:$0xff]
          %vm776 = vcmask 523264
          %777 = vst.msk [vmem:[#allocation11] sm:$0xff] %vm776, %v774
          %778 = vst.msk [vmem:[#allocation11 + $0x8] sm:$0xff] %vm776, %v775
        $region104: #{tpu_custom_call.1} parent=75 // pred_fallthru
          _
        %v779 = vld [vmem:[#allocation11] sm:$0xff]
        %v780 = vld [vmem:[#allocation11 + $0x8] sm:$0xff]
        %v781 = vld [vmem:[#allocation5] sm:$0x3]
        %v782 = vpack.c.bf16 %v780, %v779
        %v783 = vld [vmem:[%s742] sm:$0xff]
        %v784 = vld [vmem:[%s742 + $0x8] sm:$0xff]
        %v785 = vld [vmem:[%s742 + $0x10] sm:$0xff]
        %v786 = vld [vmem:[%s742 + $0x18] sm:$0xff]
        %v787 = vld [vmem:[%s742 + $0x20] sm:$0xff]
        %v788 = vld [vmem:[%s742 + $0x28] sm:$0xff]
        %v789 = vld [vmem:[%s742 + $0x30] sm:$0xff]
        %v790 = vld [vmem:[%s742 + $0x38] sm:$0xff]
        %v791 = vld [vmem:[%s625] sm:$0x3]
        %v793 = vperm.slane %v791, 0
        %v794 = vperm.slane %v791, 1
        %v805 = vunpack.c.l.b16 %v783
        %v806 = vunpack.c.h.b16 %v783
        %v807 = vunpack.c.l.b16 %v784
        %v808 = vunpack.c.h.b16 %v784
        %v809 = vunpack.c.l.b16 %v785
        %v810 = vunpack.c.h.b16 %v785
        %v811 = vunpack.c.l.b16 %v786
        %v812 = vunpack.c.h.b16 %v786
        %v813 = vunpack.c.l.b16 %v787
        %v814 = vunpack.c.h.b16 %v787
        %v815 = vunpack.c.l.b16 %v788
        %v816 = vunpack.c.h.b16 %v788
        %v817 = vunpack.c.l.b16 %v789
        %v818 = vunpack.c.h.b16 %v789
        %v819 = vunpack.c.l.b16 %v790
        %v820 = vunpack.c.h.b16 %v790
        %v821 = vpack.c.b16 %v807, %v805
        %v822 = vpack.c.b16 %v808, %v806
        %v823 = vpack.c.b16 %v811, %v809
        %v824 = vpack.c.b16 %v812, %v810
        %v825 = vpack.c.b16 %v815, %v813
        %v826 = vpack.c.b16 %v816, %v814
        %v827 = vpack.c.b16 %v819, %v817
        %v828 = vpack.c.b16 %v820, %v818
        %vm837 = vcmask 523264
        %v839 = vsel %vm837, %v782, 0
        %841 = vmatpush.bf16.msra.mxu0 0
        %842 = vmatpush.bf16.msra.mxu0 0
        %843 = vmatpush.bf16.msra.mxu0 0
        %844 = vmatpush.bf16.msra.mxu0 0
        %845 = vmatpush.bf16.msra.mxu0 %v827
        %846 = vmatpush.bf16.msra.mxu0 %v825
        %847 = vmatpush.bf16.msra.mxu0 %v823
        %848 = vmatpush.bf16.msra.mxu0 %v821
        %849 = vmatmul.bf16.gmra.mxu0 %v839
        %v850 = vpop.f32.mrf.mxu0
        %v851 = vadd.f32 %v793, %v850
        %v852 = vpop.f32.mrf.mxu0
        %v853 = vadd.f32 %v793, %v852
        %854 = vdwg.mxu0
        %855 = vmatpush.bf16.msra.mxu0 0
        %856 = vmatpush.bf16.msra.mxu0 0
        %857 = vmatpush.bf16.msra.mxu0 0
        %858 = vmatpush.bf16.msra.mxu0 0
        %859 = vmatpush.bf16.msra.mxu0 %v828
        %860 = vmatpush.bf16.msra.mxu0 %v826
        %861 = vmatpush.bf16.msra.mxu0 %v824
        %862 = vmatpush.bf16.msra.mxu0 %v822
        %863 = vmatmul.bf16.gmra.mxu0 %v839
        %v864 = vpop.f32.mrf.mxu0
        %v865 = vadd.f32 %v794, %v864
        %v866 = vpop.f32.mrf.mxu0
        %v867 = vadd.f32 %v794, %v866
        %868 = vdwg.mxu0
        %871 = vrot.lane.b32.xlu0 %v851, 112
        %v872 = vpop.permute.xlu0 %871
        %873 = vrot.lane.b32.xlu0 %v853, 112
        %v874 = vpop.permute.xlu0 %873
        %877 = vrot.lane.b32.xlu0 %v851, 96
        %v878 = vpop.permute.xlu0 %877
        %879 = vrot.lane.b32.xlu0 %v853, 96
        %v880 = vpop.permute.xlu0 %879
        %883 = vrot.lane.b32.xlu0 %v851, 80
        %v884 = vpop.permute.xlu0 %883
        %885 = vrot.lane.b32.xlu0 %v853, 80
        %v886 = vpop.permute.xlu0 %885
        %v889 = vrot.slane %v878, 4
        %vm890 = vcmask 1047556
        %v891 = vsel %vm890, %v889, %v851
        %v892 = vrot.slane %v851, 4
        %v893 = vsel %vm890, %v878, %v892
        %v895 = vunpack.c.l.s4 1983009808
        %v896 = vunpack.c.0.s8 %v895
        %v897 = vperm.slane %v891, %v896
        %v899 = vunpack.c.l.s4 1983009808
        %v900 = vunpack.c.0.s8 %v899
        %v901 = vperm.slane %v893, %v900
        %v902 = vrot.slane %v884, 4
        %v903 = vsel %vm890, %v902, %v872
        %v904 = vrot.slane %v872, 4
        %v905 = vsel %vm890, %v884, %v904
        %v907 = vunpack.c.l.s4 1983009808
        %v908 = vunpack.c.0.s8 %v907
        %v909 = vperm.slane %v903, %v908
        %v911 = vunpack.c.l.s4 1983009808
        %v912 = vunpack.c.0.s8 %v911
        %v913 = vperm.slane %v905, %v912
        %v914 = vrot.slane %v909, 4
        %v915 = vsel %vm890, %v914, %v897
        %v916 = vrot.slane %v897, 4
        %v917 = vsel %vm890, %v909, %v916
        %v919 = vunpack.c.l.s4 1934713408
        %v920 = vunpack.c.0.s8 %v919
        %v921 = vperm.slane %v915, %v920
        %v923 = vunpack.c.l.s4 1934713408
        %v924 = vunpack.c.0.s8 %v923
        %v925 = vperm.slane %v917, %v924
        %v926 = vrot.slane %v913, 4
        %v927 = vsel %vm890, %v926, %v901
        %v928 = vrot.slane %v901, 4
        %v929 = vsel %vm890, %v913, %v928
        %v931 = vunpack.c.l.s4 1934713408
        %v932 = vunpack.c.0.s8 %v931
        %v933 = vperm.slane %v927, %v932
        %v935 = vunpack.c.l.s4 1934713408
        %v936 = vunpack.c.0.s8 %v935
        %v937 = vperm.slane %v929, %v936
        %v938 = vrot.slane %v921, 4
        %v939 = vsel %vm890, 0.0, %v938
        %v940 = vrot.slane %v925, 4
        %v941 = vsel %vm890, 0.0, %v940
        %v942 = vrot.slane %v933, 4
        %v943 = vsel %vm890, 0.0, %v942
        %v944 = vrot.slane %v937, 4
        %v945 = vsel %vm890, 0.0, %v944
        %v946 = vrot.slane %v880, 4
        %v947 = vsel %vm890, %v946, %v853
        %v948 = vrot.slane %v853, 4
        %v949 = vsel %vm890, %v880, %v948
        %v951 = vunpack.c.l.s4 1983009808
        %v952 = vunpack.c.0.s8 %v951
        %v953 = vperm.slane %v947, %v952
        %v955 = vunpack.c.l.s4 1983009808
        %v956 = vunpack.c.0.s8 %v955
        %v957 = vperm.slane %v949, %v956
        %v958 = vrot.slane %v886, 4
        %v959 = vsel %vm890, %v958, %v874
        %v960 = vrot.slane %v874, 4
        %v961 = vsel %vm890, %v886, %v960
        %v963 = vunpack.c.l.s4 1983009808
        %v964 = vunpack.c.0.s8 %v963
        %v965 = vperm.slane %v959, %v964
        %v967 = vunpack.c.l.s4 1983009808
        %v968 = vunpack.c.0.s8 %v967
        %v969 = vperm.slane %v961, %v968
        %v970 = vrot.slane %v965, 4
        %v971 = vsel %vm890, %v970, %v953
        %v972 = vrot.slane %v953, 4
        %v973 = vsel %vm890, %v965, %v972
        %v975 = vunpack.c.l.s4 1934713408
        %v976 = vunpack.c.0.s8 %v975
        %v977 = vperm.slane %v971, %v976
        %v979 = vunpack.c.l.s4 1934713408
        %v980 = vunpack.c.0.s8 %v979
        %v981 = vperm.slane %v973, %v980
        %v982 = vrot.slane %v969, 4
        %v983 = vsel %vm890, %v982, %v957
        %v984 = vrot.slane %v957, 4
        %v985 = vsel %vm890, %v969, %v984
        %v987 = vunpack.c.l.s4 1934713408
        %v988 = vunpack.c.0.s8 %v987
        %v989 = vperm.slane %v983, %v988
        %v991 = vunpack.c.l.s4 1934713408
        %v992 = vunpack.c.0.s8 %v991
        %v993 = vperm.slane %v985, %v992
        %v994 = vrot.slane %v977, 4
        %v995 = vsel %vm890, 0.0, %v994
        %v996 = vrot.slane %v981, 4
        %v997 = vsel %vm890, 0.0, %v996
        %v998 = vrot.slane %v989, 4
        %v999 = vsel %vm890, 0.0, %v998
        %v1000 = vrot.slane %v993, 4
        %v1001 = vsel %vm890, 0.0, %v1000
        %v1002 = vsel %vm890, %v940, %v921
        %v1004 = vunpack.c.l.s4 1983009808
        %v1005 = vunpack.c.0.s8 %v1004
        %v1006 = vperm.slane %v1002, %v1005
        %v1007 = vrot.slane %v941, 4
        %v1008 = vsel %vm890, %v1007, %v939
        %v1010 = vunpack.c.l.s4 1983009808
        %v1011 = vunpack.c.0.s8 %v1010
        %v1012 = vperm.slane %v1008, %v1011
        %v1013 = vsel %vm890, %v944, %v933
        %v1015 = vunpack.c.l.s4 1983009808
        %v1016 = vunpack.c.0.s8 %v1015
        %v1017 = vperm.slane %v1013, %v1016
        %v1018 = vrot.slane %v945, 4
        %v1019 = vsel %vm890, %v1018, %v943
        %v1021 = vunpack.c.l.s4 1983009808
        %v1022 = vunpack.c.0.s8 %v1021
        %v1023 = vperm.slane %v1019, %v1022
        %v1024 = vrot.slane %v1012, 4
        %v1025 = vsel %vm890, %v1024, %v1006
        %v1026 = vrot.slane %v1006, 4
        %v1027 = vsel %vm890, %v1012, %v1026
        %v1029 = vunpack.c.l.s4 1934713408
        %v1030 = vunpack.c.0.s8 %v1029
        %v1031 = vperm.slane %v1025, %v1030
        %v1033 = vunpack.c.l.s4 1934713408
        %v1034 = vunpack.c.0.s8 %v1033
        %v1035 = vperm.slane %v1027, %v1034
        %v1036 = vrot.slane %v1023, 4
        %v1037 = vsel %vm890, %v1036, %v1017
        %v1038 = vrot.slane %v1017, 4
        %v1039 = vsel %vm890, %v1023, %v1038
        %v1041 = vunpack.c.l.s4 1934713408
        %v1042 = vunpack.c.0.s8 %v1041
        %v1043 = vperm.slane %v1037, %v1042
        %v1045 = vunpack.c.l.s4 1934713408
        %v1046 = vunpack.c.0.s8 %v1045
        %v1047 = vperm.slane %v1039, %v1046
        %v1048 = vrot.slane %v1043, 4
        %v1049 = vsel %vm890, %v1048, %v1031
        %v1050 = vrot.slane %v1031, 4
        %v1051 = vsel %vm890, %v1043, %v1050
        %v1052 = vrot.slane %v1047, 4
        %v1053 = vsel %vm890, %v1052, %v1035
        %v1054 = vrot.slane %v1035, 4
        %v1055 = vsel %vm890, %v1047, %v1054
        %v1056 = vsel %vm890, %v996, %v977
        %v1058 = vunpack.c.l.s4 1983009808
        %v1059 = vunpack.c.0.s8 %v1058
        %v1060 = vperm.slane %v1056, %v1059
        %v1061 = vrot.slane %v997, 4
        %v1062 = vsel %vm890, %v1061, %v995
        %v1064 = vunpack.c.l.s4 1983009808
        %v1065 = vunpack.c.0.s8 %v1064
        %v1066 = vperm.slane %v1062, %v1065
        %v1067 = vsel %vm890, %v1000, %v989
        %v1069 = vunpack.c.l.s4 1983009808
        %v1070 = vunpack.c.0.s8 %v1069
        %v1071 = vperm.slane %v1067, %v1070
        %v1072 = vrot.slane %v1001, 4
        %v1073 = vsel %vm890, %v1072, %v999
        %v1075 = vunpack.c.l.s4 1983009808
        %v1076 = vunpack.c.0.s8 %v1075
        %v1077 = vperm.slane %v1073, %v1076
        %v1078 = vrot.slane %v1066, 4
        %v1079 = vsel %vm890, %v1078, %v1060
        %v1080 = vrot.slane %v1060, 4
        %v1081 = vsel %vm890, %v1066, %v1080
        %v1083 = vunpack.c.l.s4 1934713408
        %v1084 = vunpack.c.0.s8 %v1083
        %v1085 = vperm.slane %v1079, %v1084
        %v1087 = vunpack.c.l.s4 1934713408
        %v1088 = vunpack.c.0.s8 %v1087
        %v1089 = vperm.slane %v1081, %v1088
        %v1090 = vrot.slane %v1077, 4
        %v1091 = vsel %vm890, %v1090, %v1071
        %v1092 = vrot.slane %v1071, 4
        %v1093 = vsel %vm890, %v1077, %v1092
        %v1095 = vunpack.c.l.s4 1934713408
        %v1096 = vunpack.c.0.s8 %v1095
        %v1097 = vperm.slane %v1091, %v1096
        %v1099 = vunpack.c.l.s4 1934713408
        %v1100 = vunpack.c.0.s8 %v1099
        %v1101 = vperm.slane %v1093, %v1100
        %v1102 = vrot.slane %v1097, 4
        %v1103 = vsel %vm890, %v1102, %v1085
        %v1104 = vrot.slane %v1085, 4
        %v1105 = vsel %vm890, %v1097, %v1104
        %v1106 = vrot.slane %v1101, 4
        %v1107 = vsel %vm890, %v1106, %v1089
        %v1108 = vrot.slane %v1089, 4
        %v1109 = vsel %vm890, %v1101, %v1108
        %v1110 = vpack.c.bf16 %v1049, %v1049
        %v1111 = vpack.c.bf16 %v1051, %v1051
        %v1112 = vpack.c.bf16 %v1053, %v1053
        %v1113 = vpack.c.bf16 %v1055, %v1055
        %v1114 = vpack.c.bf16 %v1103, %v1103
        %v1115 = vpack.c.bf16 %v1105, %v1105
        %v1116 = vpack.c.bf16 %v1107, %v1107
        %v1117 = vpack.c.bf16 %v1109, %v1109
        %1118 = vrot.lane.b32.xlu0 %v851, 64
        %v1119 = vpop.permute.xlu0 %1118
        %1120 = vrot.lane.b32.xlu0 %v853, 64
        %v1121 = vpop.permute.xlu0 %1120
        %1122 = vrot.lane.b32.xlu0 %v872, 64
        %v1123 = vpop.permute.xlu0 %1122
        %1124 = vrot.lane.b32.xlu0 %v874, 64
        %v1125 = vpop.permute.xlu0 %1124
        %1126 = vrot.lane.b32.xlu0 %v878, 64
        %v1127 = vpop.permute.xlu0 %1126
        %1128 = vrot.lane.b32.xlu0 %v880, 64
        %v1129 = vpop.permute.xlu0 %1128
        %1130 = vrot.lane.b32.xlu0 %v884, 64
        %v1131 = vpop.permute.xlu0 %1130
        %1132 = vrot.lane.b32.xlu0 %v886, 64
        %v1133 = vpop.permute.xlu0 %1132
        %v1142 = vrot.slane %v1127, 4
        %v1143 = vsel %vm890, %v1142, %v1119
        %v1144 = vrot.slane %v1119, 4
        %v1145 = vsel %vm890, %v1127, %v1144
        %v1147 = vunpack.c.l.s4 1983009808
        %v1148 = vunpack.c.0.s8 %v1147
        %v1149 = vperm.slane %v1143, %v1148
        %v1151 = vunpack.c.l.s4 1983009808
        %v1152 = vunpack.c.0.s8 %v1151
        %v1153 = vperm.slane %v1145, %v1152
        %v1154 = vrot.slane %v1131, 4
        %v1155 = vsel %vm890, %v1154, %v1123
        %v1156 = vrot.slane %v1123, 4
        %v1157 = vsel %vm890, %v1131, %v1156
        %v1159 = vunpack.c.l.s4 1983009808
        %v1160 = vunpack.c.0.s8 %v1159
        %v1161 = vperm.slane %v1155, %v1160
        %v1163 = vunpack.c.l.s4 1983009808
        %v1164 = vunpack.c.0.s8 %v1163
        %v1165 = vperm.slane %v1157, %v1164
        %v1166 = vrot.slane %v1161, 4
        %v1167 = vsel %vm890, %v1166, %v1149
        %v1168 = vrot.slane %v1149, 4
        %v1169 = vsel %vm890, %v1161, %v1168
        %v1171 = vunpack.c.l.s4 1934713408
        %v1172 = vunpack.c.0.s8 %v1171
        %v1173 = vperm.slane %v1167, %v1172
        %v1175 = vunpack.c.l.s4 1934713408
        %v1176 = vunpack.c.0.s8 %v1175
        %v1177 = vperm.slane %v1169, %v1176
        %v1178 = vrot.slane %v1165, 4
        %v1179 = vsel %vm890, %v1178, %v1153
        %v1180 = vrot.slane %v1153, 4
        %v1181 = vsel %vm890, %v1165, %v1180
        %v1183 = vunpack.c.l.s4 1934713408
        %v1184 = vunpack.c.0.s8 %v1183
        %v1185 = vperm.slane %v1179, %v1184
        %v1187 = vunpack.c.l.s4 1934713408
        %v1188 = vunpack.c.0.s8 %v1187
        %v1189 = vperm.slane %v1181, %v1188
        %v1190 = vrot.slane %v1173, 4
        %v1191 = vsel %vm890, 0.0, %v1190
        %v1192 = vrot.slane %v1177, 4
        %v1193 = vsel %vm890, 0.0, %v1192
        %v1194 = vrot.slane %v1185, 4
        %v1195 = vsel %vm890, 0.0, %v1194
        %v1196 = vrot.slane %v1189, 4
        %v1197 = vsel %vm890, 0.0, %v1196
        %v1198 = vrot.slane %v1129, 4
        %v1199 = vsel %vm890, %v1198, %v1121
        %v1200 = vrot.slane %v1121, 4
        %v1201 = vsel %vm890, %v1129, %v1200
        %v1203 = vunpack.c.l.s4 1983009808
        %v1204 = vunpack.c.0.s8 %v1203
        %v1205 = vperm.slane %v1199, %v1204
        %v1207 = vunpack.c.l.s4 1983009808
        %v1208 = vunpack.c.0.s8 %v1207
        %v1209 = vperm.slane %v1201, %v1208
        %v1210 = vrot.slane %v1133, 4
        %v1211 = vsel %vm890, %v1210, %v1125
        %v1212 = vrot.slane %v1125, 4
        %v1213 = vsel %vm890, %v1133, %v1212
        %v1215 = vunpack.c.l.s4 1983009808
        %v1216 = vunpack.c.0.s8 %v1215
        %v1217 = vperm.slane %v1211, %v1216
        %v1219 = vunpack.c.l.s4 1983009808
        %v1220 = vunpack.c.0.s8 %v1219
        %v1221 = vperm.slane %v1213, %v1220
        %v1222 = vrot.slane %v1217, 4
        %v1223 = vsel %vm890, %v1222, %v1205
        %v1224 = vrot.slane %v1205, 4
        %v1225 = vsel %vm890, %v1217, %v1224
        %v1227 = vunpack.c.l.s4 1934713408
        %v1228 = vunpack.c.0.s8 %v1227
        %v1229 = vperm.slane %v1223, %v1228
        %v1231 = vunpack.c.l.s4 1934713408
        %v1232 = vunpack.c.0.s8 %v1231
        %v1233 = vperm.slane %v1225, %v1232
        %v1234 = vrot.slane %v1221, 4
        %v1235 = vsel %vm890, %v1234, %v1209
        %v1236 = vrot.slane %v1209, 4
        %v1237 = vsel %vm890, %v1221, %v1236
        %v1239 = vunpack.c.l.s4 1934713408
        %v1240 = vunpack.c.0.s8 %v1239
        %v1241 = vperm.slane %v1235, %v1240
        %v1243 = vunpack.c.l.s4 1934713408
        %v1244 = vunpack.c.0.s8 %v1243
        %v1245 = vperm.slane %v1237, %v1244
        %v1246 = vrot.slane %v1229, 4
        %v1247 = vsel %vm890, 0.0, %v1246
        %v1248 = vrot.slane %v1233, 4
        %v1249 = vsel %vm890, 0.0, %v1248
        %v1250 = vrot.slane %v1241, 4
        %v1251 = vsel %vm890, 0.0, %v1250
        %v1252 = vrot.slane %v1245, 4
        %v1253 = vsel %vm890, 0.0, %v1252
        %v1254 = vsel %vm890, %v1192, %v1173
        %v1256 = vunpack.c.l.s4 1983009808
        %v1257 = vunpack.c.0.s8 %v1256
        %v1258 = vperm.slane %v1254, %v1257
        %v1259 = vrot.slane %v1193, 4
        %v1260 = vsel %vm890, %v1259, %v1191
        %v1262 = vunpack.c.l.s4 1983009808
        %v1263 = vunpack.c.0.s8 %v1262
        %v1264 = vperm.slane %v1260, %v1263
        %v1265 = vsel %vm890, %v1196, %v1185
        %v1267 = vunpack.c.l.s4 1983009808
        %v1268 = vunpack.c.0.s8 %v1267
        %v1269 = vperm.slane %v1265, %v1268
        %v1270 = vrot.slane %v1197, 4
        %v1271 = vsel %vm890, %v1270, %v1195
        %v1273 = vunpack.c.l.s4 1983009808
        %v1274 = vunpack.c.0.s8 %v1273
        %v1275 = vperm.slane %v1271, %v1274
        %v1276 = vrot.slane %v1264, 4
        %v1277 = vsel %vm890, %v1276, %v1258
        %v1278 = vrot.slane %v1258, 4
        %v1279 = vsel %vm890, %v1264, %v1278
        %v1281 = vunpack.c.l.s4 1934713408
        %v1282 = vunpack.c.0.s8 %v1281
        %v1283 = vperm.slane %v1277, %v1282
        %v1285 = vunpack.c.l.s4 1934713408
        %v1286 = vunpack.c.0.s8 %v1285
        %v1287 = vperm.slane %v1279, %v1286
        %v1288 = vrot.slane %v1275, 4
        %v1289 = vsel %vm890, %v1288, %v1269
        %v1290 = vrot.slane %v1269, 4
        %v1291 = vsel %vm890, %v1275, %v1290
        %v1293 = vunpack.c.l.s4 1934713408
        %v1294 = vunpack.c.0.s8 %v1293
        %v1295 = vperm.slane %v1289, %v1294
        %v1297 = vunpack.c.l.s4 1934713408
        %v1298 = vunpack.c.0.s8 %v1297
        %v1299 = vperm.slane %v1291, %v1298
        %v1300 = vrot.slane %v1295, 4
        %v1301 = vsel %vm890, %v1300, %v1283
        %v1302 = vrot.slane %v1283, 4
        %v1303 = vsel %vm890, %v1295, %v1302
        %v1304 = vrot.slane %v1299, 4
        %v1305 = vsel %vm890, %v1304, %v1287
        %v1306 = vrot.slane %v1287, 4
        %v1307 = vsel %vm890, %v1299, %v1306
        %v1308 = vsel %vm890, %v1248, %v1229
        %v1310 = vunpack.c.l.s4 1983009808
        %v1311 = vunpack.c.0.s8 %v1310
        %v1312 = vperm.slane %v1308, %v1311
        %v1313 = vrot.slane %v1249, 4
        %v1314 = vsel %vm890, %v1313, %v1247
        %v1316 = vunpack.c.l.s4 1983009808
        %v1317 = vunpack.c.0.s8 %v1316
        %v1318 = vperm.slane %v1314, %v1317
        %v1319 = vsel %vm890, %v1252, %v1241
        %v1321 = vunpack.c.l.s4 1983009808
        %v1322 = vunpack.c.0.s8 %v1321
        %v1323 = vperm.slane %v1319, %v1322
        %v1324 = vrot.slane %v1253, 4
        %v1325 = vsel %vm890, %v1324, %v1251
        %v1327 = vunpack.c.l.s4 1983009808
        %v1328 = vunpack.c.0.s8 %v1327
        %v1329 = vperm.slane %v1325, %v1328
        %v1330 = vrot.slane %v1318, 4
        %v1331 = vsel %vm890, %v1330, %v1312
        %v1332 = vrot.slane %v1312, 4
        %v1333 = vsel %vm890, %v1318, %v1332
        %v1335 = vunpack.c.l.s4 1934713408
        %v1336 = vunpack.c.0.s8 %v1335
        %v1337 = vperm.slane %v1331, %v1336
        %v1339 = vunpack.c.l.s4 1934713408
        %v1340 = vunpack.c.0.s8 %v1339
        %v1341 = vperm.slane %v1333, %v1340
        %v1342 = vrot.slane %v1329, 4
        %v1343 = vsel %vm890, %v1342, %v1323
        %v1344 = vrot.slane %v1323, 4
        %v1345 = vsel %vm890, %v1329, %v1344
        %v1347 = vunpack.c.l.s4 1934713408
        %v1348 = vunpack.c.0.s8 %v1347
        %v1349 = vperm.slane %v1343, %v1348
        %v1351 = vunpack.c.l.s4 1934713408
        %v1352 = vunpack.c.0.s8 %v1351
        %v1353 = vperm.slane %v1345, %v1352
        %v1354 = vrot.slane %v1349, 4
        %v1355 = vsel %vm890, %v1354, %v1337
        %v1356 = vrot.slane %v1337, 4
        %v1357 = vsel %vm890, %v1349, %v1356
        %v1358 = vrot.slane %v1353, 4
        %v1359 = vsel %vm890, %v1358, %v1341
        %v1360 = vrot.slane %v1341, 4
        %v1361 = vsel %vm890, %v1353, %v1360
        %v1362 = vpack.c.bf16 %v1301, %v1301
        %v1363 = vpack.c.bf16 %v1303, %v1303
        %v1364 = vpack.c.bf16 %v1305, %v1305
        %v1365 = vpack.c.bf16 %v1307, %v1307
        %v1366 = vpack.c.bf16 %v1355, %v1355
        %v1367 = vpack.c.bf16 %v1357, %v1357
        %v1368 = vpack.c.bf16 %v1359, %v1359
        %v1369 = vpack.c.bf16 %v1361, %v1361
        %1372 = vrot.lane.b32.xlu0 %v865, 112
        %v1373 = vpop.permute.xlu0 %1372
        %1374 = vrot.lane.b32.xlu0 %v867, 112
        %v1375 = vpop.permute.xlu0 %1374
        %1378 = vrot.lane.b32.xlu0 %v865, 96
        %v1379 = vpop.permute.xlu0 %1378
        %1380 = vrot.lane.b32.xlu0 %v867, 96
        %v1381 = vpop.permute.xlu0 %1380
        %1384 = vrot.lane.b32.xlu0 %v865, 80
        %v1385 = vpop.permute.xlu0 %1384
        %1386 = vrot.lane.b32.xlu0 %v867, 80
        %v1387 = vpop.permute.xlu0 %1386
        %v1390 = vrot.slane %v1379, 4
        %v1391 = vsel %vm890, %v1390, %v865
        %v1392 = vrot.slane %v865, 4
        %v1393 = vsel %vm890, %v1379, %v1392
        %v1395 = vunpack.c.l.s4 1983009808
        %v1396 = vunpack.c.0.s8 %v1395
        %v1397 = vperm.slane %v1391, %v1396
        %v1399 = vunpack.c.l.s4 1983009808
        %v1400 = vunpack.c.0.s8 %v1399
        %v1401 = vperm.slane %v1393, %v1400
        %v1402 = vrot.slane %v1385, 4
        %v1403 = vsel %vm890, %v1402, %v1373
        %v1404 = vrot.slane %v1373, 4
        %v1405 = vsel %vm890, %v1385, %v1404
        %v1407 = vunpack.c.l.s4 1983009808
        %v1408 = vunpack.c.0.s8 %v1407
        %v1409 = vperm.slane %v1403, %v1408
        %v1411 = vunpack.c.l.s4 1983009808
        %v1412 = vunpack.c.0.s8 %v1411
        %v1413 = vperm.slane %v1405, %v1412
        %v1414 = vrot.slane %v1409, 4
        %v1415 = vsel %vm890, %v1414, %v1397
        %v1416 = vrot.slane %v1397, 4
        %v1417 = vsel %vm890, %v1409, %v1416
        %v1419 = vunpack.c.l.s4 1934713408
        %v1420 = vunpack.c.0.s8 %v1419
        %v1421 = vperm.slane %v1415, %v1420
        %v1423 = vunpack.c.l.s4 1934713408
        %v1424 = vunpack.c.0.s8 %v1423
        %v1425 = vperm.slane %v1417, %v1424
        %v1426 = vrot.slane %v1413, 4
        %v1427 = vsel %vm890, %v1426, %v1401
        %v1428 = vrot.slane %v1401, 4
        %v1429 = vsel %vm890, %v1413, %v1428
        %v1431 = vunpack.c.l.s4 1934713408
        %v1432 = vunpack.c.0.s8 %v1431
        %v1433 = vperm.slane %v1427, %v1432
        %v1435 = vunpack.c.l.s4 1934713408
        %v1436 = vunpack.c.0.s8 %v1435
        %v1437 = vperm.slane %v1429, %v1436
        %v1438 = vrot.slane %v1421, 4
        %v1439 = vsel %vm890, 0.0, %v1438
        %v1440 = vrot.slane %v1425, 4
        %v1441 = vsel %vm890, 0.0, %v1440
        %v1442 = vrot.slane %v1433, 4
        %v1443 = vsel %vm890, 0.0, %v1442
        %v1444 = vrot.slane %v1437, 4
        %v1445 = vsel %vm890, 0.0, %v1444
        %v1446 = vrot.slane %v1381, 4
        %v1447 = vsel %vm890, %v1446, %v867
        %v1448 = vrot.slane %v867, 4
        %v1449 = vsel %vm890, %v1381, %v1448
        %v1451 = vunpack.c.l.s4 1983009808
        %v1452 = vunpack.c.0.s8 %v1451
        %v1453 = vperm.slane %v1447, %v1452
        %v1455 = vunpack.c.l.s4 1983009808
        %v1456 = vunpack.c.0.s8 %v1455
        %v1457 = vperm.slane %v1449, %v1456
        %v1458 = vrot.slane %v1387, 4
        %v1459 = vsel %vm890, %v1458, %v1375
        %v1460 = vrot.slane %v1375, 4
        %v1461 = vsel %vm890, %v1387, %v1460
        %v1463 = vunpack.c.l.s4 1983009808
        %v1464 = vunpack.c.0.s8 %v1463
        %v1465 = vperm.slane %v1459, %v1464
        %v1467 = vunpack.c.l.s4 1983009808
        %v1468 = vunpack.c.0.s8 %v1467
        %v1469 = vperm.slane %v1461, %v1468
        %v1470 = vrot.slane %v1465, 4
        %v1471 = vsel %vm890, %v1470, %v1453
        %v1472 = vrot.slane %v1453, 4
        %v1473 = vsel %vm890, %v1465, %v1472
        %v1475 = vunpack.c.l.s4 1934713408
        %v1476 = vunpack.c.0.s8 %v1475
        %v1477 = vperm.slane %v1471, %v1476
        %v1479 = vunpack.c.l.s4 1934713408
        %v1480 = vunpack.c.0.s8 %v1479
        %v1481 = vperm.slane %v1473, %v1480
        %v1482 = vrot.slane %v1469, 4
        %v1483 = vsel %vm890, %v1482, %v1457
        %v1484 = vrot.slane %v1457, 4
        %v1485 = vsel %vm890, %v1469, %v1484
        %v1487 = vunpack.c.l.s4 1934713408
        %v1488 = vunpack.c.0.s8 %v1487
        %v1489 = vperm.slane %v1483, %v1488
        %v1491 = vunpack.c.l.s4 1934713408
        %v1492 = vunpack.c.0.s8 %v1491
        %v1493 = vperm.slane %v1485, %v1492
        %v1494 = vrot.slane %v1477, 4
        %v1495 = vsel %vm890, 0.0, %v1494
        %v1496 = vrot.slane %v1481, 4
        %v1497 = vsel %vm890, 0.0, %v1496
        %v1498 = vrot.slane %v1489, 4
        %v1499 = vsel %vm890, 0.0, %v1498
        %v1500 = vrot.slane %v1493, 4
        %v1501 = vsel %vm890, 0.0, %v1500
        %v1502 = vsel %vm890, %v1440, %v1421
        %v1504 = vunpack.c.l.s4 1983009808
        %v1505 = vunpack.c.0.s8 %v1504
        %v1506 = vperm.slane %v1502, %v1505
        %v1507 = vrot.slane %v1441, 4
        %v1508 = vsel %vm890, %v1507, %v1439
        %v1510 = vunpack.c.l.s4 1983009808
        %v1511 = vunpack.c.0.s8 %v1510
        %v1512 = vperm.slane %v1508, %v1511
        %v1513 = vsel %vm890, %v1444, %v1433
        %v1515 = vunpack.c.l.s4 1983009808
        %v1516 = vunpack.c.0.s8 %v1515
        %v1517 = vperm.slane %v1513, %v1516
        %v1518 = vrot.slane %v1445, 4
        %v1519 = vsel %vm890, %v1518, %v1443
        %v1521 = vunpack.c.l.s4 1983009808
        %v1522 = vunpack.c.0.s8 %v1521
        %v1523 = vperm.slane %v1519, %v1522
        %v1524 = vrot.slane %v1512, 4
        %v1525 = vsel %vm890, %v1524, %v1506
        %v1526 = vrot.slane %v1506, 4
        %v1527 = vsel %vm890, %v1512, %v1526
        %v1529 = vunpack.c.l.s4 1934713408
        %v1530 = vunpack.c.0.s8 %v1529
        %v1531 = vperm.slane %v1525, %v1530
        %v1533 = vunpack.c.l.s4 1934713408
        %v1534 = vunpack.c.0.s8 %v1533
        %v1535 = vperm.slane %v1527, %v1534
        %v1536 = vrot.slane %v1523, 4
        %v1537 = vsel %vm890, %v1536, %v1517
        %v1538 = vrot.slane %v1517, 4
        %v1539 = vsel %vm890, %v1523, %v1538
        %v1541 = vunpack.c.l.s4 1934713408
        %v1542 = vunpack.c.0.s8 %v1541
        %v1543 = vperm.slane %v1537, %v1542
        %v1545 = vunpack.c.l.s4 1934713408
        %v1546 = vunpack.c.0.s8 %v1545
        %v1547 = vperm.slane %v1539, %v1546
        %v1548 = vrot.slane %v1543, 4
        %v1549 = vsel %vm890, %v1548, %v1531
        %v1550 = vrot.slane %v1531, 4
        %v1551 = vsel %vm890, %v1543, %v1550
        %v1552 = vrot.slane %v1547, 4
        %v1553 = vsel %vm890, %v1552, %v1535
        %v1554 = vrot.slane %v1535, 4
        %v1555 = vsel %vm890, %v1547, %v1554
        %v1556 = vsel %vm890, %v1496, %v1477
        %v1558 = vunpack.c.l.s4 1983009808
        %v1559 = vunpack.c.0.s8 %v1558
        %v1560 = vperm.slane %v1556, %v1559
        %v1561 = vrot.slane %v1497, 4
        %v1562 = vsel %vm890, %v1561, %v1495
        %v1564 = vunpack.c.l.s4 1983009808
        %v1565 = vunpack.c.0.s8 %v1564
        %v1566 = vperm.slane %v1562, %v1565
        %v1567 = vsel %vm890, %v1500, %v1489
        %v1569 = vunpack.c.l.s4 1983009808
        %v1570 = vunpack.c.0.s8 %v1569
        %v1571 = vperm.slane %v1567, %v1570
        %v1572 = vrot.slane %v1501, 4
        %v1573 = vsel %vm890, %v1572, %v1499
        %v1575 = vunpack.c.l.s4 1983009808
        %v1576 = vunpack.c.0.s8 %v1575
        %v1577 = vperm.slane %v1573, %v1576
        %v1578 = vrot.slane %v1566, 4
        %v1579 = vsel %vm890, %v1578, %v1560
        %v1580 = vrot.slane %v1560, 4
        %v1581 = vsel %vm890, %v1566, %v1580
        %v1583 = vunpack.c.l.s4 1934713408
        %v1584 = vunpack.c.0.s8 %v1583
        %v1585 = vperm.slane %v1579, %v1584
        %v1587 = vunpack.c.l.s4 1934713408
        %v1588 = vunpack.c.0.s8 %v1587
        %v1589 = vperm.slane %v1581, %v1588
        %v1590 = vrot.slane %v1577, 4
        %v1591 = vsel %vm890, %v1590, %v1571
        %v1592 = vrot.slane %v1571, 4
        %v1593 = vsel %vm890, %v1577, %v1592
        %v1595 = vunpack.c.l.s4 1934713408
        %v1596 = vunpack.c.0.s8 %v1595
        %v1597 = vperm.slane %v1591, %v1596
        %v1599 = vunpack.c.l.s4 1934713408
        %v1600 = vunpack.c.0.s8 %v1599
        %v1601 = vperm.slane %v1593, %v1600
        %v1602 = vrot.slane %v1597, 4
        %v1603 = vsel %vm890, %v1602, %v1585
        %v1604 = vrot.slane %v1585, 4
        %v1605 = vsel %vm890, %v1597, %v1604
        %v1606 = vrot.slane %v1601, 4
        %v1607 = vsel %vm890, %v1606, %v1589
        %v1608 = vrot.slane %v1589, 4
        %v1609 = vsel %vm890, %v1601, %v1608
        %v1610 = vpack.c.bf16 %v1549, %v1549
        %v1611 = vpack.c.bf16 %v1551, %v1551
        %v1612 = vpack.c.bf16 %v1553, %v1553
        %v1613 = vpack.c.bf16 %v1555, %v1555
        %v1614 = vpack.c.bf16 %v1603, %v1603
        %v1615 = vpack.c.bf16 %v1605, %v1605
        %v1616 = vpack.c.bf16 %v1607, %v1607
        %v1617 = vpack.c.bf16 %v1609, %v1609
        %vm1618 = vcmask 130048
        %v1620 = vsel %vm1618, %v1110, 0
        %v1623 = vsel %vm1618, %v1362, 0
        %1625 = vmatpush.bf16.xpose.msra.mxu0 0
        %1626 = vmatpush.bf16.xpose.msra.mxu0 0
        %1627 = vmatpush.bf16.xpose.msra.mxu0 0
        %1628 = vmatpush.bf16.xpose.msra.mxu0 0
        %1629 = vmatpush.bf16.xpose.msra.mxu0 0
        %1630 = vmatpush.bf16.xpose.msra.mxu0 0
        %1631 = vmatpush.bf16.xpose.msra.mxu0 0
        %1632 = vmatpush.bf16.xpose.msra.mxu0 %v1623
        %1633 = vmatmul.bf16.gmra.mxu0 %v1620
        %v1634 = vpop.f32.mrf.mxu0
        %v1635 = vadd.f32 0.0, %v1634
        %v1636 = vpop.f32.mrf.mxu0
        %1637 = vdwg.mxu0
        %v1639 = vsel %vm1618, %v1111, 0
        %v1642 = vsel %vm1618, %v1363, 0
        %1644 = vmatpush.bf16.xpose.msra.mxu0 0
        %1645 = vmatpush.bf16.xpose.msra.mxu0 0
        %1646 = vmatpush.bf16.xpose.msra.mxu0 0
        %1647 = vmatpush.bf16.xpose.msra.mxu0 0
        %1648 = vmatpush.bf16.xpose.msra.mxu0 0
        %1649 = vmatpush.bf16.xpose.msra.mxu0 0
        %1650 = vmatpush.bf16.xpose.msra.mxu0 0
        %1651 = vmatpush.bf16.xpose.msra.mxu0 %v1642
        %1652 = vmatmul.bf16.gmra.mxu0 %v1639
        %v1653 = vpop.f32.mrf.mxu0
        %v1654 = vadd.f32 0.0, %v1653
        %v1655 = vpop.f32.mrf.mxu0
        %1656 = vdwg.mxu0
        %v1658 = vsel %vm1618, %v1112, 0
        %v1661 = vsel %vm1618, %v1364, 0
        %1663 = vmatpush.bf16.xpose.msra.mxu0 0
        %1664 = vmatpush.bf16.xpose.msra.mxu0 0
        %1665 = vmatpush.bf16.xpose.msra.mxu0 0
        %1666 = vmatpush.bf16.xpose.msra.mxu0 0
        %1667 = vmatpush.bf16.xpose.msra.mxu0 0
        %1668 = vmatpush.bf16.xpose.msra.mxu0 0
        %1669 = vmatpush.bf16.xpose.msra.mxu0 0
        %1670 = vmatpush.bf16.xpose.msra.mxu0 %v1661
        %1671 = vmatmul.bf16.gmra.mxu0 %v1658
        %v1672 = vpop.f32.mrf.mxu0
        %v1673 = vadd.f32 0.0, %v1672
        %v1674 = vpop.f32.mrf.mxu0
        %1675 = vdwg.mxu0
        %v1677 = vsel %vm1618, %v1113, 0
        %v1680 = vsel %vm1618, %v1365, 0
        %1682 = vmatpush.bf16.xpose.msra.mxu0 0
        %1683 = vmatpush.bf16.xpose.msra.mxu0 0
        %1684 = vmatpush.bf16.xpose.msra.mxu0 0
        %1685 = vmatpush.bf16.xpose.msra.mxu0 0
        %1686 = vmatpush.bf16.xpose.msra.mxu0 0
        %1687 = vmatpush.bf16.xpose.msra.mxu0 0
        %1688 = vmatpush.bf16.xpose.msra.mxu0 0
        %1689 = vmatpush.bf16.xpose.msra.mxu0 %v1680
        %1690 = vmatmul.bf16.gmra.mxu0 %v1677
        %v1691 = vpop.f32.mrf.mxu0
        %v1692 = vadd.f32 0.0, %v1691
        %v1693 = vpop.f32.mrf.mxu0
        %1694 = vdwg.mxu0
        %v1696 = vsel %vm1618, %v1114, 0
        %v1699 = vsel %vm1618, %v1366, 0
        %1701 = vmatpush.bf16.xpose.msra.mxu0 0
        %1702 = vmatpush.bf16.xpose.msra.mxu0 0
        %1703 = vmatpush.bf16.xpose.msra.mxu0 0
        %1704 = vmatpush.bf16.xpose.msra.mxu0 0
        %1705 = vmatpush.bf16.xpose.msra.mxu0 0
        %1706 = vmatpush.bf16.xpose.msra.mxu0 0
        %1707 = vmatpush.bf16.xpose.msra.mxu0 0
        %1708 = vmatpush.bf16.xpose.msra.mxu0 %v1699
        %1709 = vmatmul.bf16.gmra.mxu0 %v1696
        %v1710 = vpop.f32.mrf.mxu0
        %v1711 = vadd.f32 0.0, %v1710
        %v1712 = vpop.f32.mrf.mxu0
        %1713 = vdwg.mxu0
        %v1715 = vsel %vm1618, %v1115, 0
        %v1718 = vsel %vm1618, %v1367, 0
        %1720 = vmatpush.bf16.xpose.msra.mxu0 0
        %1721 = vmatpush.bf16.xpose.msra.mxu0 0
        %1722 = vmatpush.bf16.xpose.msra.mxu0 0
        %1723 = vmatpush.bf16.xpose.msra.mxu0 0
        %1724 = vmatpush.bf16.xpose.msra.mxu0 0
        %1725 = vmatpush.bf16.xpose.msra.mxu0 0
        %1726 = vmatpush.bf16.xpose.msra.mxu0 0
        %1727 = vmatpush.bf16.xpose.msra.mxu0 %v1718
        %1728 = vmatmul.bf16.gmra.mxu0 %v1715
        %v1729 = vpop.f32.mrf.mxu0
        %v1730 = vadd.f32 0.0, %v1729
        %v1731 = vpop.f32.mrf.mxu0
        %1732 = vdwg.mxu0
        %v1734 = vsel %vm1618, %v1116, 0
        %v1737 = vsel %vm1618, %v1368, 0
        %1739 = vmatpush.bf16.xpose.msra.mxu0 0
        %1740 = vmatpush.bf16.xpose.msra.mxu0 0
        %1741 = vmatpush.bf16.xpose.msra.mxu0 0
        %1742 = vmatpush.bf16.xpose.msra.mxu0 0
        %1743 = vmatpush.bf16.xpose.msra.mxu0 0
        %1744 = vmatpush.bf16.xpose.msra.mxu0 0
        %1745 = vmatpush.bf16.xpose.msra.mxu0 0
        %1746 = vmatpush.bf16.xpose.msra.mxu0 %v1737
        %1747 = vmatmul.bf16.gmra.mxu0 %v1734
        %v1748 = vpop.f32.mrf.mxu0
        %v1749 = vadd.f32 0.0, %v1748
        %v1750 = vpop.f32.mrf.mxu0
        %1751 = vdwg.mxu0
        %v1753 = vsel %vm1618, %v1117, 0
        %v1756 = vsel %vm1618, %v1369, 0
        %1758 = vmatpush.bf16.xpose.msra.mxu0 0
        %1759 = vmatpush.bf16.xpose.msra.mxu0 0
        %1760 = vmatpush.bf16.xpose.msra.mxu0 0
        %1761 = vmatpush.bf16.xpose.msra.mxu0 0
        %1762 = vmatpush.bf16.xpose.msra.mxu0 0
        %1763 = vmatpush.bf16.xpose.msra.mxu0 0
        %1764 = vmatpush.bf16.xpose.msra.mxu0 0
        %1765 = vmatpush.bf16.xpose.msra.mxu0 %v1756
        %1766 = vmatmul.bf16.gmra.mxu0 %v1753
        %v1767 = vpop.f32.mrf.mxu0
        %v1768 = vadd.f32 0.0, %v1767
        %v1769 = vpop.f32.mrf.mxu0
        %1770 = vdwg.mxu0
        %v1772 = vrot.slane %v781, 1
        %v1773 = vperm.slane %v781, 0
        %v1774 = vperm.slane %v1772, 0
        %v1777 = vadd.f32 %v1635, %v1773
        %v1778 = vadd.f32 %v1654, %v1773
        %v1779 = vadd.f32 %v1673, %v1773
        %v1780 = vadd.f32 %v1692, %v1773
        %v1781 = vadd.f32 %v1711, %v1774
        %v1782 = vadd.f32 %v1730, %v1774
        %v1783 = vadd.f32 %v1749, %v1774
        %v1784 = vadd.f32 %v1768, %v1774
        %vm1785 = vcmask 64512
        %v1786 = vsel %vm1785, %v1777, -inf
        %1787 = vmax.xlane.f32.xlu0 %v1786
        %v1788 = vpop.xlane.xlu0 %1787
        %v1789 = vsel %vm1785, %v1778, -inf
        %1790 = vmax.xlane.f32.xlu0 %v1789
        %v1791 = vpop.xlane.xlu0 %1790
        %v1792 = vsel %vm1785, %v1779, -inf
        %1793 = vmax.xlane.f32.xlu0 %v1792
        %v1794 = vpop.xlane.xlu0 %1793
        %v1795 = vsel %vm1785, %v1780, -inf
        %1796 = vmax.xlane.f32.xlu0 %v1795
        %v1797 = vpop.xlane.xlu0 %1796
        %v1798 = vsel %vm1785, %v1781, -inf
        %1799 = vmax.xlane.f32.xlu0 %v1798
        %v1800 = vpop.xlane.xlu0 %1799
        %v1801 = vsel %vm1785, %v1782, -inf
        %1802 = vmax.xlane.f32.xlu0 %v1801
        %v1803 = vpop.xlane.xlu0 %1802
        %v1804 = vsel %vm1785, %v1783, -inf
        %1805 = vmax.xlane.f32.xlu0 %v1804
        %v1806 = vpop.xlane.xlu0 %1805
        %v1807 = vsel %vm1785, %v1784, -inf
        %1808 = vmax.xlane.f32.xlu0 %v1807
        %v1809 = vpop.xlane.xlu0 %1808
        %v1810 = vsub.f32 %v1777, %v1788
        %v1811 = vsub.f32 %v1778, %v1791
        %v1812 = vsub.f32 %v1779, %v1794
        %v1813 = vsub.f32 %v1780, %v1797
        %v1814 = vsub.f32 %v1781, %v1800
        %v1815 = vsub.f32 %v1782, %v1803
        %v1816 = vsub.f32 %v1783, %v1806
        %v1817 = vsub.f32 %v1784, %v1809
        %v1818 = vmul.f32 %v1810, 1.442695
        %v1819 = vpow.pop %v1818
        %v1820 = vmul.f32 %v1811, 1.442695
        %v1821 = vpow.pop %v1820
        %v1822 = vmul.f32 %v1812, 1.442695
        %v1823 = vpow.pop %v1822
        %v1824 = vmul.f32 %v1813, 1.442695
        %v1825 = vpow.pop %v1824
        %v1826 = vmul.f32 %v1814, 1.442695
        %v1827 = vpow.pop %v1826
        %v1828 = vmul.f32 %v1815, 1.442695
        %v1829 = vpow.pop %v1828
        %v1830 = vmul.f32 %v1816, 1.442695
        %v1831 = vpow.pop %v1830
        %v1832 = vmul.f32 %v1817, 1.442695
        %v1833 = vpow.pop %v1832
        %v1834 = vsel %vm1785, %v1819, 0.0
        %1835 = vadd.xlane.f32.xlu0 %v1834
        %v1836 = vpop.xlane.xlu0 %1835
        %v1837 = vsel %vm1785, %v1821, 0.0
        %1838 = vadd.xlane.f32.xlu0 %v1837
        %v1839 = vpop.xlane.xlu0 %1838
        %v1840 = vsel %vm1785, %v1823, 0.0
        %1841 = vadd.xlane.f32.xlu0 %v1840
        %v1842 = vpop.xlane.xlu0 %1841
        %v1843 = vsel %vm1785, %v1825, 0.0
        %1844 = vadd.xlane.f32.xlu0 %v1843
        %v1845 = vpop.xlane.xlu0 %1844
        %v1846 = vsel %vm1785, %v1827, 0.0
        %1847 = vadd.xlane.f32.xlu0 %v1846
        %v1848 = vpop.xlane.xlu0 %1847
        %v1849 = vsel %vm1785, %v1829, 0.0
        %1850 = vadd.xlane.f32.xlu0 %v1849
        %v1851 = vpop.xlane.xlu0 %1850
        %v1852 = vsel %vm1785, %v1831, 0.0
        %1853 = vadd.xlane.f32.xlu0 %v1852
        %v1854 = vpop.xlane.xlu0 %1853
        %v1855 = vsel %vm1785, %v1833, 0.0
        %1856 = vadd.xlane.f32.xlu0 %v1855
        %v1857 = vpop.xlane.xlu0 %1856
        %v1858 = vrcp.pop %v1836
        %v1859 = vrcp.pop %v1839
        %v1860 = vrcp.pop %v1842
        %v1861 = vrcp.pop %v1845
        %v1862 = vrcp.pop %v1848
        %v1863 = vrcp.pop %v1851
        %v1864 = vrcp.pop %v1854
        %v1865 = vrcp.pop %v1857
        %v1866 = vmul.f32 %v1819, %v1858
        %v1867 = vmul.f32 %v1821, %v1859
        %v1868 = vmul.f32 %v1823, %v1860
        %v1869 = vmul.f32 %v1825, %v1861
        %v1870 = vmul.f32 %v1827, %v1862
        %v1871 = vmul.f32 %v1829, %v1863
        %v1872 = vmul.f32 %v1831, %v1864
        %v1873 = vmul.f32 %v1833, %v1865
        %v1874 = vpack.c.bf16 %v1866, %v1866
        %v1875 = vpack.c.bf16 %v1867, %v1867
        %v1876 = vpack.c.bf16 %v1868, %v1868
        %v1877 = vpack.c.bf16 %v1869, %v1869
        %v1878 = vpack.c.bf16 %v1870, %v1870
        %v1879 = vpack.c.bf16 %v1871, %v1871
        %v1880 = vpack.c.bf16 %v1872, %v1872
        %v1881 = vpack.c.bf16 %v1873, %v1873
        %v1883 = vsel %vm1785, %v1874, 0
        %vm1885 = vcmask 1043456
        %v1887 = vsel %vm1885, %v1610, 0
        %1889 = vmatpush.bf16.msra.mxu0 0
        %1890 = vmatpush.bf16.msra.mxu0 0
        %1891 = vmatpush.bf16.msra.mxu0 0
        %1892 = vmatpush.bf16.msra.mxu0 0
        %1893 = vmatpush.bf16.msra.mxu0 0
        %1894 = vmatpush.bf16.msra.mxu0 0
        %1895 = vmatpush.bf16.msra.mxu0 0
        %1896 = vmatpush.bf16.msra.mxu0 %v1887
        %1897 = vmatmul.bf16.gmra.mxu0 %v1883
        %v1898 = vpop.f32.mrf.mxu0
        %v1899 = vadd.f32 0.0, %v1898
        %v1900 = vpop.f32.mrf.mxu0
        %1901 = vdwg.mxu0
        %v1903 = vsel %vm1785, %v1875, 0
        %v1906 = vsel %vm1885, %v1611, 0
        %1908 = vmatpush.bf16.msra.mxu0 0
        %1909 = vmatpush.bf16.msra.mxu0 0
        %1910 = vmatpush.bf16.msra.mxu0 0
        %1911 = vmatpush.bf16.msra.mxu0 0
        %1912 = vmatpush.bf16.msra.mxu0 0
        %1913 = vmatpush.bf16.msra.mxu0 0
        %1914 = vmatpush.bf16.msra.mxu0 0
        %1915 = vmatpush.bf16.msra.mxu0 %v1906
        %1916 = vmatmul.bf16.gmra.mxu0 %v1903
        %v1917 = vpop.f32.mrf.mxu0
        %v1918 = vadd.f32 0.0, %v1917
        %v1919 = vpop.f32.mrf.mxu0
        %1920 = vdwg.mxu0
        %v1922 = vsel %vm1785, %v1876, 0
        %v1925 = vsel %vm1885, %v1612, 0
        %1927 = vmatpush.bf16.msra.mxu0 0
        %1928 = vmatpush.bf16.msra.mxu0 0
        %1929 = vmatpush.bf16.msra.mxu0 0
        %1930 = vmatpush.bf16.msra.mxu0 0
        %1931 = vmatpush.bf16.msra.mxu0 0
        %1932 = vmatpush.bf16.msra.mxu0 0
        %1933 = vmatpush.bf16.msra.mxu0 0
        %1934 = vmatpush.bf16.msra.mxu0 %v1925
        %1935 = vmatmul.bf16.gmra.mxu0 %v1922
        %v1936 = vpop.f32.mrf.mxu0
        %v1937 = vadd.f32 0.0, %v1936
        %v1938 = vpop.f32.mrf.mxu0
        %1939 = vdwg.mxu0
        %v1941 = vsel %vm1785, %v1877, 0
        %v1944 = vsel %vm1885, %v1613, 0
        %1946 = vmatpush.bf16.msra.mxu0 0
        %1947 = vmatpush.bf16.msra.mxu0 0
        %1948 = vmatpush.bf16.msra.mxu0 0
        %1949 = vmatpush.bf16.msra.mxu0 0
        %1950 = vmatpush.bf16.msra.mxu0 0
        %1951 = vmatpush.bf16.msra.mxu0 0
        %1952 = vmatpush.bf16.msra.mxu0 0
        %1953 = vmatpush.bf16.msra.mxu0 %v1944
        %1954 = vmatmul.bf16.gmra.mxu0 %v1941
        %v1955 = vpop.f32.mrf.mxu0
        %v1956 = vadd.f32 0.0, %v1955
        %v1957 = vpop.f32.mrf.mxu0
        %1958 = vdwg.mxu0
        %v1960 = vsel %vm1785, %v1878, 0
        %v1963 = vsel %vm1885, %v1614, 0
        %1965 = vmatpush.bf16.msra.mxu0 0
        %1966 = vmatpush.bf16.msra.mxu0 0
        %1967 = vmatpush.bf16.msra.mxu0 0
        %1968 = vmatpush.bf16.msra.mxu0 0
        %1969 = vmatpush.bf16.msra.mxu0 0
        %1970 = vmatpush.bf16.msra.mxu0 0
        %1971 = vmatpush.bf16.msra.mxu0 0
        %1972 = vmatpush.bf16.msra.mxu0 %v1963
        %1973 = vmatmul.bf16.gmra.mxu0 %v1960
        %v1974 = vpop.f32.mrf.mxu0
        %v1975 = vadd.f32 0.0, %v1974
        %v1976 = vpop.f32.mrf.mxu0
        %1977 = vdwg.mxu0
        %v1979 = vsel %vm1785, %v1879, 0
        %v1982 = vsel %vm1885, %v1615, 0
        %1984 = vmatpush.bf16.msra.mxu0 0
        %1985 = vmatpush.bf16.msra.mxu0 0
        %1986 = vmatpush.bf16.msra.mxu0 0
        %1987 = vmatpush.bf16.msra.mxu0 0
        %1988 = vmatpush.bf16.msra.mxu0 0
        %1989 = vmatpush.bf16.msra.mxu0 0
        %1990 = vmatpush.bf16.msra.mxu0 0
        %1991 = vmatpush.bf16.msra.mxu0 %v1982
        %1992 = vmatmul.bf16.gmra.mxu0 %v1979
        %v1993 = vpop.f32.mrf.mxu0
        %v1994 = vadd.f32 0.0, %v1993
        %v1995 = vpop.f32.mrf.mxu0
        %1996 = vdwg.mxu0
        %v1998 = vsel %vm1785, %v1880, 0
        %v2001 = vsel %vm1885, %v1616, 0
        %2003 = vmatpush.bf16.msra.mxu0 0
        %2004 = vmatpush.bf16.msra.mxu0 0
        %2005 = vmatpush.bf16.msra.mxu0 0
        %2006 = vmatpush.bf16.msra.mxu0 0
        %2007 = vmatpush.bf16.msra.mxu0 0
        %2008 = vmatpush.bf16.msra.mxu0 0
        %2009 = vmatpush.bf16.msra.mxu0 0
        %2010 = vmatpush.bf16.msra.mxu0 %v2001
        %2011 = vmatmul.bf16.gmra.mxu0 %v1998
        %v2012 = vpop.f32.mrf.mxu0
        %v2013 = vadd.f32 0.0, %v2012
        %v2014 = vpop.f32.mrf.mxu0
        %2015 = vdwg.mxu0
        %v2017 = vsel %vm1785, %v1881, 0
        %v2020 = vsel %vm1885, %v1617, 0
        %2022 = vmatpush.bf16.msra.mxu0 0
        %2023 = vmatpush.bf16.msra.mxu0 0
        %2024 = vmatpush.bf16.msra.mxu0 0
        %2025 = vmatpush.bf16.msra.mxu0 0
        %2026 = vmatpush.bf16.msra.mxu0 0
        %2027 = vmatpush.bf16.msra.mxu0 0
        %2028 = vmatpush.bf16.msra.mxu0 0
        %2029 = vmatpush.bf16.msra.mxu0 %v2020
        %2030 = vmatmul.bf16.gmra.mxu0 %v2017
        %v2031 = vpop.f32.mrf.mxu0
        %v2032 = vadd.f32 0.0, %v2031
        %v2033 = vpop.f32.mrf.mxu0
        %2034 = vdwg.mxu0
        %v2035 = vrot.slane %v1937, 4
        %v2036 = vsel %vm890, %v2035, %v1899
        %v2037 = vrot.slane %v1899, 4
        %v2038 = vsel %vm890, %v1937, %v2037
        %v2040 = vunpack.c.l.s4 1983009808
        %v2041 = vunpack.c.0.s8 %v2040
        %v2042 = vperm.slane %v2036, %v2041
        %v2044 = vunpack.c.l.s4 1983009808
        %v2045 = vunpack.c.0.s8 %v2044
        %v2046 = vperm.slane %v2038, %v2045
        %v2047 = vrot.slane %v1956, 4
        %v2048 = vsel %vm890, %v2047, %v1918
        %v2049 = vrot.slane %v1918, 4
        %v2050 = vsel %vm890, %v1956, %v2049
        %v2052 = vunpack.c.l.s4 1983009808
        %v2053 = vunpack.c.0.s8 %v2052
        %v2054 = vperm.slane %v2048, %v2053
        %v2056 = vunpack.c.l.s4 1983009808
        %v2057 = vunpack.c.0.s8 %v2056
        %v2058 = vperm.slane %v2050, %v2057
        %v2059 = vrot.slane %v2054, 4
        %v2060 = vsel %vm890, %v2059, %v2042
        %v2061 = vrot.slane %v2042, 4
        %v2062 = vsel %vm890, %v2054, %v2061
        %v2064 = vunpack.c.l.s4 1934713408
        %v2065 = vunpack.c.0.s8 %v2064
        %v2066 = vperm.slane %v2060, %v2065
        %v2068 = vunpack.c.l.s4 1934713408
        %v2069 = vunpack.c.0.s8 %v2068
        %v2070 = vperm.slane %v2062, %v2069
        %v2071 = vrot.slane %v2058, 4
        %v2072 = vsel %vm890, %v2071, %v2046
        %v2073 = vrot.slane %v2046, 4
        %v2074 = vsel %vm890, %v2058, %v2073
        %v2076 = vunpack.c.l.s4 1934713408
        %v2077 = vunpack.c.0.s8 %v2076
        %v2078 = vperm.slane %v2072, %v2077
        %v2080 = vunpack.c.l.s4 1934713408
        %v2081 = vunpack.c.0.s8 %v2080
        %v2082 = vperm.slane %v2074, %v2081
        %v2083 = vrot.slane %v2066, 4
        %v2084 = vsel %vm890, 0.0, %v2083
        %v2085 = vrot.slane %v2070, 4
        %v2086 = vsel %vm890, 0.0, %v2085
        %v2087 = vrot.slane %v2078, 4
        %v2088 = vsel %vm890, 0.0, %v2087
        %v2089 = vrot.slane %v2082, 4
        %v2090 = vsel %vm890, 0.0, %v2089
        %v2091 = vrot.slane %v2013, 4
        %v2092 = vsel %vm890, %v2091, %v1975
        %v2093 = vrot.slane %v1975, 4
        %v2094 = vsel %vm890, %v2013, %v2093
        %v2096 = vunpack.c.l.s4 1983009808
        %v2097 = vunpack.c.0.s8 %v2096
        %v2098 = vperm.slane %v2092, %v2097
        %v2100 = vunpack.c.l.s4 1983009808
        %v2101 = vunpack.c.0.s8 %v2100
        %v2102 = vperm.slane %v2094, %v2101
        %v2103 = vrot.slane %v2032, 4
        %v2104 = vsel %vm890, %v2103, %v1994
        %v2105 = vrot.slane %v1994, 4
        %v2106 = vsel %vm890, %v2032, %v2105
        %v2108 = vunpack.c.l.s4 1983009808
        %v2109 = vunpack.c.0.s8 %v2108
        %v2110 = vperm.slane %v2104, %v2109
        %v2112 = vunpack.c.l.s4 1983009808
        %v2113 = vunpack.c.0.s8 %v2112
        %v2114 = vperm.slane %v2106, %v2113
        %v2115 = vrot.slane %v2110, 4
        %v2116 = vsel %vm890, %v2115, %v2098
        %v2117 = vrot.slane %v2098, 4
        %v2118 = vsel %vm890, %v2110, %v2117
        %v2120 = vunpack.c.l.s4 1934713408
        %v2121 = vunpack.c.0.s8 %v2120
        %v2122 = vperm.slane %v2116, %v2121
        %v2124 = vunpack.c.l.s4 1934713408
        %v2125 = vunpack.c.0.s8 %v2124
        %v2126 = vperm.slane %v2118, %v2125
        %v2127 = vrot.slane %v2114, 4
        %v2128 = vsel %vm890, %v2127, %v2102
        %v2129 = vrot.slane %v2102, 4
        %v2130 = vsel %vm890, %v2114, %v2129
        %v2132 = vunpack.c.l.s4 1934713408
        %v2133 = vunpack.c.0.s8 %v2132
        %v2134 = vperm.slane %v2128, %v2133
        %v2136 = vunpack.c.l.s4 1934713408
        %v2137 = vunpack.c.0.s8 %v2136
        %v2138 = vperm.slane %v2130, %v2137
        %v2139 = vrot.slane %v2122, 4
        %v2140 = vsel %vm890, 0.0, %v2139
        %v2141 = vrot.slane %v2126, 4
        %v2142 = vsel %vm890, 0.0, %v2141
        %v2143 = vrot.slane %v2134, 4
        %v2144 = vsel %vm890, 0.0, %v2143
        %v2145 = vrot.slane %v2138, 4
        %v2146 = vsel %vm890, 0.0, %v2145
        %v2147 = vsel %vm890, %v2085, %v2066
        %v2149 = vunpack.c.l.s4 1983009808
        %v2150 = vunpack.c.0.s8 %v2149
        %v2151 = vperm.slane %v2147, %v2150
        %v2152 = vrot.slane %v2086, 4
        %v2153 = vsel %vm890, %v2152, %v2084
        %v2155 = vunpack.c.l.s4 1983009808
        %v2156 = vunpack.c.0.s8 %v2155
        %v2157 = vperm.slane %v2153, %v2156
        %v2158 = vsel %vm890, %v2089, %v2078
        %v2160 = vunpack.c.l.s4 1983009808
        %v2161 = vunpack.c.0.s8 %v2160
        %v2162 = vperm.slane %v2158, %v2161
        %v2163 = vrot.slane %v2090, 4
        %v2164 = vsel %vm890, %v2163, %v2088
        %v2166 = vunpack.c.l.s4 1983009808
        %v2167 = vunpack.c.0.s8 %v2166
        %v2168 = vperm.slane %v2164, %v2167
        %v2169 = vrot.slane %v2157, 4
        %v2170 = vsel %vm890, %v2169, %v2151
        %v2171 = vrot.slane %v2151, 4
        %v2172 = vsel %vm890, %v2157, %v2171
        %v2174 = vunpack.c.l.s4 1934713408
        %v2175 = vunpack.c.0.s8 %v2174
        %v2176 = vperm.slane %v2170, %v2175
        %v2178 = vunpack.c.l.s4 1934713408
        %v2179 = vunpack.c.0.s8 %v2178
        %v2180 = vperm.slane %v2172, %v2179
        %v2181 = vrot.slane %v2168, 4
        %v2182 = vsel %vm890, %v2181, %v2162
        %v2183 = vrot.slane %v2162, 4
        %v2184 = vsel %vm890, %v2168, %v2183
        %v2186 = vunpack.c.l.s4 1934713408
        %v2187 = vunpack.c.0.s8 %v2186
        %v2188 = vperm.slane %v2182, %v2187
        %v2190 = vunpack.c.l.s4 1934713408
        %v2191 = vunpack.c.0.s8 %v2190
        %v2192 = vperm.slane %v2184, %v2191
        %v2193 = vrot.slane %v2188, 4
        %v2194 = vsel %vm890, %v2193, %v2176
        %v2195 = vrot.slane %v2176, 4
        %v2196 = vsel %vm890, %v2188, %v2195
        %v2197 = vrot.slane %v2192, 4
        %v2198 = vsel %vm890, %v2197, %v2180
        %v2199 = vrot.slane %v2180, 4
        %v2200 = vsel %vm890, %v2192, %v2199
        %v2201 = vsel %vm890, %v2141, %v2122
        %v2203 = vunpack.c.l.s4 1983009808
        %v2204 = vunpack.c.0.s8 %v2203
        %v2205 = vperm.slane %v2201, %v2204
        %v2206 = vrot.slane %v2142, 4
        %v2207 = vsel %vm890, %v2206, %v2140
        %v2209 = vunpack.c.l.s4 1983009808
        %v2210 = vunpack.c.0.s8 %v2209
        %v2211 = vperm.slane %v2207, %v2210
        %v2212 = vsel %vm890, %v2145, %v2134
        %v2214 = vunpack.c.l.s4 1983009808
        %v2215 = vunpack.c.0.s8 %v2214
        %v2216 = vperm.slane %v2212, %v2215
        %v2217 = vrot.slane %v2146, 4
        %v2218 = vsel %vm890, %v2217, %v2144
        %v2220 = vunpack.c.l.s4 1983009808
        %v2221 = vunpack.c.0.s8 %v2220
        %v2222 = vperm.slane %v2218, %v2221
        %v2223 = vrot.slane %v2211, 4
        %v2224 = vsel %vm890, %v2223, %v2205
        %v2225 = vrot.slane %v2205, 4
        %v2226 = vsel %vm890, %v2211, %v2225
        %v2228 = vunpack.c.l.s4 1934713408
        %v2229 = vunpack.c.0.s8 %v2228
        %v2230 = vperm.slane %v2224, %v2229
        %v2232 = vunpack.c.l.s4 1934713408
        %v2233 = vunpack.c.0.s8 %v2232
        %v2234 = vperm.slane %v2226, %v2233
        %v2235 = vrot.slane %v2222, 4
        %v2236 = vsel %vm890, %v2235, %v2216
        %v2237 = vrot.slane %v2216, 4
        %v2238 = vsel %vm890, %v2222, %v2237
        %v2240 = vunpack.c.l.s4 1934713408
        %v2241 = vunpack.c.0.s8 %v2240
        %v2242 = vperm.slane %v2236, %v2241
        %v2244 = vunpack.c.l.s4 1934713408
        %v2245 = vunpack.c.0.s8 %v2244
        %v2246 = vperm.slane %v2238, %v2245
        %v2247 = vrot.slane %v2242, 4
        %v2248 = vsel %vm890, %v2247, %v2230
        %v2249 = vrot.slane %v2230, 4
        %v2250 = vsel %vm890, %v2242, %v2249
        %v2251 = vrot.slane %v2246, 4
        %v2252 = vsel %vm890, %v2251, %v2234
        %v2253 = vrot.slane %v2234, 4
        %v2254 = vsel %vm890, %v2246, %v2253
        %2257 = vrot.lane.b32.xlu0 %v2196, 16
        %v2258 = vpop.permute.xlu0 %2257
        %2259 = vrot.lane.b32.xlu0 %v2250, 16
        %v2260 = vpop.permute.xlu0 %2259
        %2265 = vrot.lane.b32.xlu0 %v2198, 32
        %v2266 = vpop.permute.xlu0 %2265
        %2267 = vrot.lane.b32.xlu0 %v2252, 32
        %v2268 = vpop.permute.xlu0 %2267
        %2273 = vrot.lane.b32.xlu0 %v2200, 48
        %v2274 = vpop.permute.xlu0 %2273
        %2275 = vrot.lane.b32.xlu0 %v2254, 48
        %v2276 = vpop.permute.xlu0 %2275
        %v2279 = vsel %vm1618, %v2194, %v2258
        %v2280 = vsel %vm1618, %v2248, %v2260
        %vm2281 = vcmask 261120
        %v2282 = vsel %vm2281, %v2279, %v2266
        %v2283 = vsel %vm2281, %v2280, %v2268
        %vm2284 = vcmask 392192
        %v2285 = vsel %vm2284, %v2282, %v2274
        %v2286 = vsel %vm2284, %v2283, %v2276
        %v2287 = vpack.c.bf16 %v2286, %v2285
        %v2288 = vld [vmem:[%s747] sm:$0xf]
        %v2289 = vld [vmem:[%s747 + $0x4] sm:$0xf]
        %v2290 = vld [vmem:[%s747 + $0x8] sm:$0xf]
        %v2291 = vld [vmem:[%s747 + $0xc] sm:$0xf]
        %v2292 = vld [vmem:[%s747 + $0x10] sm:$0xf]
        %v2293 = vld [vmem:[%s747 + $0x14] sm:$0xf]
        %v2294 = vld [vmem:[%s747 + $0x18] sm:$0xf]
        %v2295 = vld [vmem:[%s747 + $0x1c] sm:$0xf]
        %v2296 = vld [vmem:[%s750] sm:$0x1]
        %v2298 = vperm.slane %v2296, 0
        %v2308 = vunpack.c.l.b16 %v2288
        %v2309 = vunpack.c.l.b16 %v2289
        %v2310 = vunpack.c.l.b16 %v2290
        %v2311 = vunpack.c.l.b16 %v2291
        %v2312 = vunpack.c.l.b16 %v2292
        %v2313 = vunpack.c.l.b16 %v2293
        %v2314 = vunpack.c.l.b16 %v2294
        %v2315 = vunpack.c.l.b16 %v2295
        %v2316 = vpack.c.b16 %v2309, %v2308
        %v2317 = vpack.c.b16 %v2311, %v2310
        %v2318 = vpack.c.b16 %v2313, %v2312
        %v2319 = vpack.c.b16 %v2315, %v2314
        %v2325 = vsel %vm837, %v2287, 0
        %2327 = vmatpush.bf16.msra.mxu0 0
        %2328 = vmatpush.bf16.msra.mxu0 0
        %2329 = vmatpush.bf16.msra.mxu0 0
        %2330 = vmatpush.bf16.msra.mxu0 0
        %2331 = vmatpush.bf16.msra.mxu0 %v2319
        %2332 = vmatpush.bf16.msra.mxu0 %v2318
        %2333 = vmatpush.bf16.msra.mxu0 %v2317
        %2334 = vmatpush.bf16.msra.mxu0 %v2316
        %2335 = vmatmul.bf16.gmra.mxu0 %v2325
        %v2336 = vpop.f32.mrf.mxu0
        %v2337 = vadd.f32 %v2298, %v2336
        %v2338 = vpop.f32.mrf.mxu0
        %v2339 = vadd.f32 %v2298, %v2338
        %2340 = vdwg.mxu0
        %v2341 = vadd.f32 %v779, %v2337
        %v2342 = vadd.f32 %v780, %v2339
        %v2343 = vsel %vm837, %v2341, 0.0
        %2344 = vadd.xlane.f32.xlu0 %v2343
        %v2345 = vpop.xlane.xlu0 %2344
        %v2346 = vsel %vm837, %v2342, 0.0
        %2347 = vadd.xlane.f32.xlu0 %v2346
        %v2348 = vpop.xlane.xlu0 %2347
        %v2349 = vrcp.pop 64.0
        %v2350 = vmul.f32 64.0, %v2349
        %v2351 = vsub.f32 1.0, %v2350
        %v2352 = vmul.f32 %v2349, %v2351
        %v2353 = vadd.f32 %v2349, %v2352
        %vm2354 = vweird.f32 %v2349
        %v2355 = vsel %vm2354, %v2349, %v2353
        %v2356 = vmul.f32 %v2345, %v2355
        %v2357 = vmul.f32 %v2348, %v2355
        %v2358 = vsub.f32 %v2341, %v2356
        %v2359 = vsub.f32 %v2342, %v2357
        %v2360 = vmul.f32 %v2358, %v2358
        %v2361 = vmul.f32 %v2359, %v2359
        %v2362 = vsel %vm837, %v2360, 0.0
        %2363 = vadd.xlane.f32.xlu0 %v2362
        %v2364 = vpop.xlane.xlu0 %2363
        %v2365 = vsel %vm837, %v2361, 0.0
        %2366 = vadd.xlane.f32.xlu0 %v2365
        %v2367 = vpop.xlane.xlu0 %2366
        %v2368 = vmul.f32 %v2364, %v2355
        %v2369 = vmul.f32 %v2367, %v2355
        %v2370 = vadd.f32 %v2368, 1e-05
        %v2371 = vadd.f32 %v2369, 1e-05
        %v2372 = vrsqrt.pop %v2370
        %v2373 = vmul.f32 %v2372, %v2370
        %v2374 = vmul.f32 %v2373, %v2372
        %v2375 = vmul.f32 0.5, %v2374
        %v2376 = vsub.f32 1.5, %v2375
        %v2377 = vmul.f32 %v2372, %v2376
        %vm2378 = vweird.f32 %v2370
        %vm2379 = vweird.f32 %v2372
        %vm2380 = vmor %vm2378, %vm2379
        %v2381 = vsel %vm2380, %v2372, %v2377
        %v2382 = vrsqrt.pop %v2371
        %v2383 = vmul.f32 %v2382, %v2371
        %v2384 = vmul.f32 %v2383, %v2382
        %v2385 = vmul.f32 0.5, %v2384
        %v2386 = vsub.f32 1.5, %v2385
        %v2387 = vmul.f32 %v2382, %v2386
        %vm2388 = vweird.f32 %v2371
        %vm2389 = vweird.f32 %v2382
        %vm2390 = vmor %vm2388, %vm2389
        %v2391 = vsel %vm2390, %v2382, %v2387
        %v2392 = vmul.f32 %v2358, %v2381
        %v2393 = vmul.f32 %v2359, %v2391
        %v2394 = vld [vmem:[%s753] sm:$0x1]
        %v2396 = vperm.slane %v2394, 0
        %v2398 = vmul.f32 %v2392, %v2396
        %v2399 = vmul.f32 %v2393, %v2396
        %v2400 = vld [vmem:[%s634] sm:$0x1]
        %v2402 = vperm.slane %v2400, 0
        %v2404 = vadd.f32 %v2398, %v2402
        %v2405 = vadd.f32 %v2399, %v2402
        %v2406 = vpack.c.bf16 %v2405, %v2404
        %v2407 = vld [vmem:[%s644] sm:$0xf]
        %v2408 = vld [vmem:[%s644 + $0x4] sm:$0xf]
        %v2409 = vld [vmem:[%s644 + $0x8] sm:$0xf]
        %v2410 = vld [vmem:[%s644 + $0xc] sm:$0xf]
        %v2411 = vld [vmem:[%s644 + $0x10] sm:$0xf]
        %v2412 = vld [vmem:[%s644 + $0x14] sm:$0xf]
        %v2413 = vld [vmem:[%s644 + $0x18] sm:$0xf]
        %v2414 = vld [vmem:[%s644 + $0x1c] sm:$0xf]
        %v2415 = vld [vmem:[%s756] sm:$0x1]
        %v2417 = vperm.slane %v2415, 0
        %v2427 = vunpack.c.l.b16 %v2407
        %v2428 = vunpack.c.l.b16 %v2408
        %v2429 = vunpack.c.l.b16 %v2409
        %v2430 = vunpack.c.l.b16 %v2410
        %v2431 = vunpack.c.l.b16 %v2411
        %v2432 = vunpack.c.l.b16 %v2412
        %v2433 = vunpack.c.l.b16 %v2413
        %v2434 = vunpack.c.l.b16 %v2414
        %v2435 = vpack.c.b16 %v2428, %v2427
        %v2436 = vpack.c.b16 %v2430, %v2429
        %v2437 = vpack.c.b16 %v2432, %v2431
        %v2438 = vpack.c.b16 %v2434, %v2433
        %v2444 = vsel %vm837, %v2406, 0
        %2446 = vmatpush.bf16.msra.mxu0 0
        %2447 = vmatpush.bf16.msra.mxu0 0
        %2448 = vmatpush.bf16.msra.mxu0 0
        %2449 = vmatpush.bf16.msra.mxu0 0
        %2450 = vmatpush.bf16.msra.mxu0 %v2438
        %2451 = vmatpush.bf16.msra.mxu0 %v2437
        %2452 = vmatpush.bf16.msra.mxu0 %v2436
        %2453 = vmatpush.bf16.msra.mxu0 %v2435
        %2454 = vmatmul.bf16.gmra.mxu0 %v2444
        %v2455 = vpop.f32.mrf.mxu0
        %v2456 = vadd.f32 %v2417, %v2455
        %v2457 = vpop.f32.mrf.mxu0
        %v2458 = vadd.f32 %v2417, %v2457
        %2459 = vdwg.mxu0
        %v2460 = vmax.f32 %v2456, 0.0
        %v2461 = vmax.f32 %v2458, 0.0
        %v2462 = vpack.c.bf16 %v2461, %v2460
        %v2463 = vld [vmem:[%s761] sm:$0xf]
        %v2464 = vld [vmem:[%s761 + $0x4] sm:$0xf]
        %v2465 = vld [vmem:[%s761 + $0x8] sm:$0xf]
        %v2466 = vld [vmem:[%s761 + $0xc] sm:$0xf]
        %v2467 = vld [vmem:[%s761 + $0x10] sm:$0xf]
        %v2468 = vld [vmem:[%s761 + $0x14] sm:$0xf]
        %v2469 = vld [vmem:[%s761 + $0x18] sm:$0xf]
        %v2470 = vld [vmem:[%s761 + $0x1c] sm:$0xf]
        %v2471 = vld [vmem:[%s761 + $0x20] sm:$0xf]
        %v2472 = vld [vmem:[%s761 + $0x24] sm:$0xf]
        %v2473 = vld [vmem:[%s761 + $0x28] sm:$0xf]
        %v2474 = vld [vmem:[%s761 + $0x2c] sm:$0xf]
        %v2475 = vld [vmem:[%s761 + $0x30] sm:$0xf]
        %v2476 = vld [vmem:[%s761 + $0x34] sm:$0xf]
        %v2477 = vld [vmem:[%s761 + $0x38] sm:$0xf]
        %v2478 = vld [vmem:[%s761 + $0x3c] sm:$0xf]
        %v2479 = vld [vmem:[%s764] sm:$0x1]
        %v2481 = vperm.slane %v2479, 0
        %v2499 = vunpack.c.l.b16 %v2463
        %v2500 = vunpack.c.l.b16 %v2464
        %v2501 = vunpack.c.l.b16 %v2465
        %v2502 = vunpack.c.l.b16 %v2466
        %v2503 = vunpack.c.l.b16 %v2467
        %v2504 = vunpack.c.l.b16 %v2468
        %v2505 = vunpack.c.l.b16 %v2469
        %v2506 = vunpack.c.l.b16 %v2470
        %v2507 = vunpack.c.l.b16 %v2471
        %v2508 = vunpack.c.l.b16 %v2472
        %v2509 = vunpack.c.l.b16 %v2473
        %v2510 = vunpack.c.l.b16 %v2474
        %v2511 = vunpack.c.l.b16 %v2475
        %v2512 = vunpack.c.l.b16 %v2476
        %v2513 = vunpack.c.l.b16 %v2477
        %v2514 = vunpack.c.l.b16 %v2478
        %v2515 = vpack.c.b16 %v2500, %v2499
        %v2516 = vpack.c.b16 %v2502, %v2501
        %v2517 = vpack.c.b16 %v2504, %v2503
        %v2518 = vpack.c.b16 %v2506, %v2505
        %v2519 = vpack.c.b16 %v2508, %v2507
        %v2520 = vpack.c.b16 %v2510, %v2509
        %v2521 = vpack.c.b16 %v2512, %v2511
        %v2522 = vpack.c.b16 %v2514, %v2513
        %2531 = vmatpush.bf16.msra.mxu0 %v2522
        %2532 = vmatpush.bf16.msra.mxu0 %v2521
        %2533 = vmatpush.bf16.msra.mxu0 %v2520
        %2534 = vmatpush.bf16.msra.mxu0 %v2519
        %2535 = vmatpush.bf16.msra.mxu0 %v2518
        %2536 = vmatpush.bf16.msra.mxu0 %v2517
        %2537 = vmatpush.bf16.msra.mxu0 %v2516
        %2538 = vmatpush.bf16.msra.mxu0 %v2515
        %2539 = vmatmul.bf16.gmra.mxu0 %v2462
        %v2540 = vpop.f32.mrf.mxu0
        %v2541 = vadd.f32 %v2481, %v2540
        %v2542 = vpop.f32.mrf.mxu0
        %v2543 = vadd.f32 %v2481, %v2542
        %2544 = vdwg.mxu0
        %v2545 = vadd.f32 %v2404, %v2541
        %v2546 = vadd.f32 %v2405, %v2543
        %v2547 = vsel %vm837, %v2545, 0.0
        %2548 = vadd.xlane.f32.xlu0 %v2547
        %v2549 = vpop.xlane.xlu0 %2548
        %v2550 = vsel %vm837, %v2546, 0.0
        %2551 = vadd.xlane.f32.xlu0 %v2550
        %v2552 = vpop.xlane.xlu0 %2551
        %v2553 = vmul.f32 %v2549, %v2355
        %v2554 = vmul.f32 %v2552, %v2355
        %v2555 = vsub.f32 %v2545, %v2553
        %v2556 = vsub.f32 %v2546, %v2554
        %v2557 = vmul.f32 %v2555, %v2555
        %v2558 = vmul.f32 %v2556, %v2556
        %v2559 = vsel %vm837, %v2557, 0.0
        %2560 = vadd.xlane.f32.xlu0 %v2559
        %v2561 = vpop.xlane.xlu0 %2560
        %v2562 = vsel %vm837, %v2558, 0.0
        %2563 = vadd.xlane.f32.xlu0 %v2562
        %v2564 = vpop.xlane.xlu0 %2563
        %v2565 = vmul.f32 %v2561, %v2355
        %v2566 = vmul.f32 %v2564, %v2355
        %v2567 = vadd.f32 %v2565, 1e-05
        %v2568 = vadd.f32 %v2566, 1e-05
        %v2569 = vrsqrt.pop %v2567
        %v2570 = vmul.f32 %v2569, %v2567
        %v2571 = vmul.f32 %v2570, %v2569
        %v2572 = vmul.f32 0.5, %v2571
        %v2573 = vsub.f32 1.5, %v2572
        %v2574 = vmul.f32 %v2569, %v2573
        %vm2575 = vweird.f32 %v2567
        %vm2576 = vweird.f32 %v2569
        %vm2577 = vmor %vm2575, %vm2576
        %v2578 = vsel %vm2577, %v2569, %v2574
        %v2579 = vrsqrt.pop %v2568
        %v2580 = vmul.f32 %v2579, %v2568
        %v2581 = vmul.f32 %v2580, %v2579
        %v2582 = vmul.f32 0.5, %v2581
        %v2583 = vsub.f32 1.5, %v2582
        %v2584 = vmul.f32 %v2579, %v2583
        %vm2585 = vweird.f32 %v2568
        %vm2586 = vweird.f32 %v2579
        %vm2587 = vmor %vm2585, %vm2586
        %v2588 = vsel %vm2587, %v2579, %v2584
        %v2589 = vmul.f32 %v2555, %v2578
        %v2590 = vmul.f32 %v2556, %v2588
        %v2591 = vld [vmem:[%s767] sm:$0x1]
        %v2593 = vperm.slane %v2591, 0
        %v2595 = vmul.f32 %v2589, %v2593
        %v2596 = vmul.f32 %v2590, %v2593
        %v2597 = vld [vmem:[%s653] sm:$0x1]
        %v2599 = vperm.slane %v2597, 0
        %v2601 = vadd.f32 %v2595, %v2599
        %v2602 = vadd.f32 %v2596, %v2599
        %2603 = vst.msk [vmem:[#allocation11] sm:$0xff] %vm837, %v2601
        %2604 = vst.msk [vmem:[#allocation11 + $0x8] sm:$0xff] %vm837, %v2602
        // Predicated region
        $region105: #{tpu_custom_call.1} parent=75 // pred_check
          %p2605 = pneg %p422
        $region106: #{tpu_custom_call.1} parent=75 // pred_check_branch
          %2607 = sbr.rel (%p2605) target = $region108
        $region107: #{tpu_custom_call.1} parent=75 // pred_region
          %s2608 = smul.u32 2, %s32
          %2610 = vsyncadd [#allocation4], 0
          %s2611 = smul.addr %s2608, 8
          %s2612 = scalar_lea.hbm %s14, %s2611
          %s2613 = sshll.u32 [#allocation11], 4
          %s2614 = int_to_ptr.vmem [resolvable:$true] %s2613
          %s2615 = sshll.u32 %s2612, 4
          %s2616 = int_to_ptr.hbm [resolvable:$true] %s2615
          %2621 = dma.vmem_to_hbm [thread:$0]  %s2614, 256, %s2616, [#allocation4], 128, 128, 8
        $region108: #{tpu_custom_call.1} parent=75 // pred_fallthru
          _
        // Predicated region
        $region109: #{tpu_custom_call.1} parent=75 // pred_check
          %p2622 = pneg %p422
        $region110: #{tpu_custom_call.1} parent=75 // pred_check_branch
          %2624 = sbr.rel (%p2622) target = $region112
        $region111: #{tpu_custom_call.1} parent=75 // pred_region
          %2626 = dma.done [#allocation4], 256
        $region112: #{tpu_custom_call.1} parent=75 // pred_fallthru
          _
      $region76: #{tpu_custom_call.1} parent=5 // pred_fallthru
        _
      %p2627 = scmp.le.s32.totalorder 2, %s23
      // Predicated region
      $region113: #{tpu_custom_call.1} parent=5 // pred_check
        %p2628 = pneg %p2627
      $region114: #{tpu_custom_call.1} parent=5 // pred_check_branch
        %2630 = sbr.rel (%p2628) target = $region116
      $region115: #{tpu_custom_call.1} parent=5 // pred_region
        %s2631 = ssub.s32 %s23, 2
      $region116: #{tpu_custom_call.1} parent=5 // pred_fallthru
        _
    $region6: #{tpu_custom_call.1} parent=1 // loop_footer
      %s27 = sadd.s32 1, %s23
    $region7: #{tpu_custom_call.1} parent=1 // loop_footer_branch
      %22 = sbr.rel target = $region3
    $region8: #{tpu_custom_call.1} parent=1 // loop_exit
      _
    %2632 = vsyncpa [#allocation3], 1
    %s2633 = scalar_lea.sflag [#allocation3], 1
    %2634 = vsyncpa %s2633, 1
    %2635 = vsyncpa [#allocation6], 1
    %2636 = vsyncpa [#allocation4], 1
    %s2637 = scalar_lea.sflag [#allocation4], 1
    %2638 = vsyncpa %s2637, 1

</llo_original>
